<compile_context>
chip_gen: v5e
topology: v5e:2x2
jax: 0.10.0
libtpu: 0.0.40
codegen_flags: <defaults>
</compile_context>

<pallas_src>
import functools

import jax
import jax.numpy as jnp
from jax import lax
from jax.experimental import pallas as pl
from jax.experimental.pallas import tpu as pltpu


def _round_up(x, m):
    return (x + m - 1) // m * m


def _cdiv(a, b):
    return -(-a // b)


def indrnn_fused_kernel(x_ref, w_ref, u_ref, b_ref, o_ref,
                        xw_scr, o_scr, h_ref, *, depth, tc, precision):
    """One grid step == `tc` time steps of one batch tile, projection fused.

    x_ref  : (bt, tc, D)         raw input block (native layout, no wrapper transpose)
    w_ref  : (depth, D, Rp)      input weights, resident in VMEM
    u_ref  : (depth, Rp)         recurrent (diagonal) weights
    b_ref  : (depth, Rp)         biases
    o_ref  : (bt, tc, Rp)        output block, already in the final (B, T, R) layout
    xw_scr : (depth*tc, bt, Rp)  VMEM scratch: fused pre-activations for this chunk
    o_scr  : (tc, bt, Rp)        VMEM scratch: time-major staging of chunk output
    h_ref  : (bt, Rp)            VMEM scratch: h carried across time chunks
    """
    ti = pl.program_id(1)

    @pl.when(ti == 0)
    def _():
        # h_tm1 = ones(recdim), fresh chain per batch tile (matches PyTorch broadcast).
        h_ref[...] = jnp.ones_like(h_ref)

    bt, rp = h_ref.shape

    # ---- fused input projection (MXU): xw[k, t] = x_t @ w[k] + b[k] ----
    # The pre-activation tensor never round-trips through HBM.
    xb = x_ref[...]                                    # (bt, tc, D)
    xt = jnp.transpose(xb, (1, 0, 2))                  # (tc, bt, D)  time-major (in-VMEM relayout)
    x2 = xt.reshape(tc * bt, xb.shape[-1])             # (tc*bt, D)
    b_all = b_ref[...]
    for k in range(depth):                             # depth is small & static
        proj = jnp.dot(x2, w_ref[k],
                       preferred_element_type=jnp.float32,
                       precision=precision)            # (tc*bt, Rp)
        xw_scr[pl.ds(k * tc, tc)] = (proj + b_all[k:k + 1, :]).reshape(tc, bt, rp)

    # ---- serial recurrence (VPU): h = relu(h * u[k] + xw[k, t]) ----
    # u stays as (1, Rp) rows; the VPU sublane-broadcasts it at use time
    # (no depth x (bt, Rp) live broadcasts -> no vreg spills).
    u_all = u_ref[...]
    u_rows = [u_all[k:k + 1, :] for k in range(depth)]

    def step(i, h):
        for k in range(depth):
            h = jnp.maximum(h * u_rows[k] + xw_scr[k * tc + i], 0.0)   # relu (F.reul typo)
        o_scr[i] = h
        return h

    unroll = True if tc <= 16 else (8 if bt * rp <= 4096 else 4)
    h_last = lax.fori_loop(0, tc, step, h_ref[...], unroll=unroll)
    h_ref[...] = h_last

    # One in-VMEM relayout (XLU slack) -> lane-dense block store in the final
    # (batch, time, R) layout; no post-kernel transpose pass over the output.
    o_ref[...] = jnp.transpose(o_scr[...], (1, 0, 2)).astype(o_ref.dtype)


def indrnn_forward(x, w, u, b, *, tc=None, bt=None, vmem_limit_bytes=None,
                   precision=jax.lax.Precision.HIGHEST):
    """x: (B, T, D); w: (depth, D, R); u, b: (depth, R) -> (B, T, R)."""
    B, T, D = x.shape
    depth, _, R = w.shape
    out_dtype = x.dtype

    # VMEM budget: 0.75x of the queried per-core capacity (leaves headroom for
    # compiler scratch / pipelining; ~48 MiB on v7x, ~96 MiB on v5e/v6e).
    if vmem_limit_bytes is None:
        try:
            vmem_limit_bytes = int(pltpu.get_tpu_info().vmem_capacity_bytes) * 3 // 4
        except Exception:
            vmem_limit_bytes = 48 * 1024 * 1024
        vmem_limit_bytes = min(vmem_limit_bytes, 100 * 1024 * 1024)

    # Lane/sublane-friendly padding (inert: padded w/u/b/x entries are zero,
    # padded h columns collapse to 0 after one relu step and are sliced off).
    # D is NOT padded: it rides as a full-dim lane axis of the x blocks.
    Rp = _round_up(R, 128)
    Bp = _round_up(B, 8)
    f32 = jnp.float32
    w_p = jnp.pad(w.astype(f32), ((0, 0), (0, 0), (0, Rp - R)))
    u_p = jnp.pad(u.astype(f32), ((0, 0), (0, Rp - R)))
    b_p = jnp.pad(b.astype(f32), ((0, 0), (0, Rp - R)))
    x_p = jnp.pad(x.astype(f32), ((0, Bp - B), (0, 0), (0, 0)))

    # ---- batch tiling ----
    if bt is None:
        bt = Bp
        # vreg pressure: keep the carried (bt, Rp) h tile <= ~16K f32 elements.
        while bt > 8 and bt % 16 == 0 and bt * Rp > 16 * 1024:
            bt //= 2
        # give megacore (v7x) at least 2 parallel batch tiles when batch allows.
        if Bp // bt < 2 and bt > 8 and bt % 16 == 0:
            bt //= 2
    assert Bp % bt == 0 and bt % 8 == 0
    nb = Bp // bt

    # ---- time chunking (chunks divide T evenly; capped at 256 steps) ----
    out_itemsize = jnp.dtype(out_dtype).itemsize
    resident = depth * D * Rp * 4 + 2 * depth * Rp * 4 + bt * Rp * 4
    per_step = bt * (Rp * 4 * (depth + 1)       # xw scratch + out staging
                     + 2 * D * 4                # double-buffered x block
                     + 2 * Rp * out_itemsize)   # double-buffered out block
    budget = max(vmem_limit_bytes // 2 - resident, per_step)
    tc_max = int(min(256, max(8, budget // per_step)))
    if tc is None:
        if T <= tc_max:
            tc = T
        else:
            nt0 = _cdiv(T, tc_max)
            tc = _round_up(_cdiv(T, nt0), 16)
    tc = max(1, min(tc, T))
    if tc >= T:
        tc, Tp = T, T
    else:
        assert tc % 8 == 0, "time chunk must be a multiple of 8 when chunking"
        Tp = _round_up(T, tc)
    nt = Tp // tc
    if Tp != T:
        x_p = jnp.pad(x_p, ((0, 0), (0, Tp - T), (0, 0)))

    out = pl.pallas_call(
        functools.partial(indrnn_fused_kernel, depth=depth, tc=tc,
                          precision=precision),
        out_shape=jax.ShapeDtypeStruct((Bp, Tp, Rp), out_dtype),
        grid_spec=pltpu.PrefetchScalarGridSpec(
            num_scalar_prefetch=0,
            grid=(nb, nt),
            in_specs=[
                # raw input blocks, streamed (native (B, T, D) HBM layout)
                pl.BlockSpec((bt, tc, D), lambda bi, ti: (bi, ti, 0)),
                # small resident parameters
                pl.BlockSpec((depth, D, Rp), lambda bi, ti: (0, 0, 0)),
                pl.BlockSpec((depth, Rp), lambda bi, ti: (0, 0)),
                pl.BlockSpec((depth, Rp), lambda bi, ti: (0, 0)),
            ],
            out_specs=pl.BlockSpec((bt, tc, Rp), lambda bi, ti: (bi, ti, 0)),
            scratch_shapes=[
                pltpu.VMEM((depth * tc, bt, Rp), jnp.float32),  # fused pre-activations
                pltpu.VMEM((tc, bt, Rp), jnp.float32),          # chunk output staging
                pltpu.VMEM((bt, Rp), jnp.float32),              # carried h
            ],
        ),
        compiler_params=pltpu.CompilerParams(
            # batch independent -> parallel; time is the recurrence -> arbitrary
            # (time must stay the innermost/fastest grid axis for the h carry).
            dimension_semantics=("parallel", "arbitrary"),
            vmem_limit_bytes=int(vmem_limit_bytes),
        ),
    )(x_p, w_p, u_p, b_p)

    # Output is already (batch, time, R)-ordered and in out_dtype: just strip padding.
    return out[:B, :T, :R]


def indrnn_ref(x, w, u, b, precision=jax.lax.Precision.HIGHEST):
    """Plain-JAX reference matching the PyTorch forward semantics."""
    B, T, D = x.shape
    depth, _, R = w.shape
    h = jnp.ones((R,), x.dtype)
    outs = []
    for t in range(T):
        x_t = x[:, t, :]
        for k in range(depth):
            xw = jnp.dot(x_t, w[k], precision=precision)
            h = jnp.maximum(h * u[k] + xw + b[k], 0.0)
        outs.append(h)
    return jnp.stack(outs, axis=1)


if __name__ == "__main__":
    B, T, D, R, depth = 2, 8, 16, 32, 2

    key = jax.random.PRNGKey(0)
    kx, kw, ku, kb = jax.random.split(key, 4)
    x = jax.random.normal(kx, (B, T, D), jnp.float32)
    # deterministic parameter init (th.randn equivalents)
    w = jax.random.normal(kw, (depth, D, R), jnp.float32)
    u = jax.random.normal(ku, (depth, R), jnp.float32)
    b = jax.random.normal(kb, (depth, R), jnp.float32)

    out = indrnn_forward(x, w, u, b)
    out = jax.block_until_ready(out)

    ref = indrnn_ref(x, w, u, b)
    assert out.shape == (B, T, R), out.shape
    assert jnp.allclose(out, ref, atol=2e-3, rtol=2e-3), \
        float(jnp.max(jnp.abs(out - ref)))

    print("KERNEL_OK")
</pallas_src>

<mosaic_0001>
module attributes {stable_mosaic.version = 11 : i64} {
  func.func @indrnn_fused_kernel(%arg0: i32, %arg1: i32, %arg2: memref<8x8x16xf32, #tpu.memory_space<vmem>>, %arg3: memref<2x16x128xf32, #tpu.memory_space<vmem>>, %arg4: memref<2x128xf32, #tpu.memory_space<vmem>>, %arg5: memref<2x128xf32, #tpu.memory_space<vmem>>, %arg6: memref<8x8x128xf32, #tpu.memory_space<vmem>>, %arg7: memref<16x8x128xf32, #tpu.memory_space<vmem>>, %arg8: memref<8x8x128xf32, #tpu.memory_space<vmem>>, %arg9: memref<8x128xf32, #tpu.memory_space<vmem>>) attributes {dimension_semantics = [#tpu.dimension_semantics<parallel>, #tpu.dimension_semantics<arbitrary>], iteration_bounds = array<i64: 1, 1>, scalar_prefetch = 0 : i64, scratch_operands = 3 : i64, tpu.core_type = #tpu.core_type<tc>, window_params = [{transform_indices = @transform_0, window_bounds = array<i64: 8, 8, 16>}, {pipeline_mode = #tpu.pipeline_mode<synchronous>, transform_indices = @transform_1, window_bounds = array<i64: 2, 16, 128>}, {pipeline_mode = #tpu.pipeline_mode<synchronous>, transform_indices = @transform_2, window_bounds = array<i64: 2, 128>}, {pipeline_mode = #tpu.pipeline_mode<synchronous>, transform_indices = @transform_3, window_bounds = array<i64: 2, 128>}, {transform_indices = @transform_4, window_bounds = array<i64: 8, 8, 128>}]} {
    %c0_i32 = arith.constant 0 : i32
    %0 = arith.cmpi eq, %arg1, %c0_i32 : i32
    %1 = arith.extui %0 : i1 to i32
    %c0_i32_0 = arith.constant 0 : i32
    %2 = arith.cmpi ne, %1, %c0_i32_0 : i32
    scf.if %2 {
      %cst_109 = arith.constant 1.000000e+00 : f32
      %207 = vector.broadcast %cst_109 : f32 to vector<8x128xf32>
      %c0_110 = arith.constant 0 : index
      %c0_111 = arith.constant 0 : index
      %208 = vector.load %arg9[%c0_110, %c0_111] : memref<8x128xf32, #tpu.memory_space<vmem>>, vector<8x128xf32>
      tpu.vector_store %arg9[%c0_110, %c0_111], %207 {strides = array<i32>} : memref<8x128xf32, #tpu.memory_space<vmem>>, vector<8x128xf32>,
    } else {
    }
    %c0 = arith.constant 0 : index
    %c0_1 = arith.constant 0 : index
    %c0_2 = arith.constant 0 : index
    %3 = vector.load %arg2[%c0, %c0_1, %c0_2] : memref<8x8x16xf32, #tpu.memory_space<vmem>>, vector<8x8x16xf32>
    %4 = tpu.transpose %3, [1, 0, 2] : vector<8x8x16xf32> -> vector<8x8x16xf32>
    %5 = vector.shape_cast %4 : vector<8x8x16xf32> to vector<64x16xf32>
    %c0_3 = arith.constant 0 : index
    %c0_4 = arith.constant 0 : index
    %6 = vector.load %arg5[%c0_3, %c0_4] : memref<2x128xf32, #tpu.memory_space<vmem>>, vector<2x128xf32>
    %c0_5 = arith.constant 0 : index
    %c0_6 = arith.constant 0 : index
    %c0_7 = arith.constant 0 : index
    %7 = vector.load %arg3[%c0_5, %c0_6, %c0_7] : memref<2x16x128xf32, #tpu.memory_space<vmem>>, vector<1x16x128xf32>
    %8 = vector.shape_cast %7 : vector<1x16x128xf32> to vector<16x128xf32>
    %cst = arith.constant dense<0.000000e+00> : vector<64x128xf32>
    %9 = tpu.matmul %5, %8, %cst {dimension_numbers = #tpu.dot_dimension_numbers<[1], [0], [0], [1], [0, 0, 1, 1], [], []>, precision = #tpu.contract_precision<fp32>} : vector<64x16xf32>, vector<16x128xf32>, vector<64x128xf32> -> vector<64x128xf32>
    %10 = vector.extract_strided_slice %6 {offsets = [0, 0], sizes = [1, 128], strides = [1, 1]} : vector<2x128xf32> to vector<1x128xf32>
    %11 = vector.broadcast %10 : vector<1x128xf32> to vector<64x128xf32>
    %12 = arith.addf %9, %11 : vector<64x128xf32>
    %13 = vector.shape_cast %12 : vector<64x128xf32> to vector<8x8x128xf32>
    %c0_8 = arith.constant 0 : index
    %c0_9 = arith.constant 0 : index
    %c0_10 = arith.constant 0 : index
    %14 = vector.load %arg7[%c0_8, %c0_9, %c0_10] : memref<16x8x128xf32, #tpu.memory_space<vmem>>, vector<8x8x128xf32>
    tpu.vector_store %arg7[%c0_8, %c0_9, %c0_10], %13 {strides = array<i32>} : memref<16x8x128xf32, #tpu.memory_space<vmem>>, vector<8x8x128xf32>,
    %c1 = arith.constant 1 : index
    %c0_11 = arith.constant 0 : index
    %c0_12 = arith.constant 0 : index
    %15 = vector.load %arg3[%c1, %c0_11, %c0_12] : memref<2x16x128xf32, #tpu.memory_space<vmem>>, vector<1x16x128xf32>
    %16 = vector.shape_cast %15 : vector<1x16x128xf32> to vector<16x128xf32>
    %cst_13 = arith.constant dense<0.000000e+00> : vector<64x128xf32>
    %17 = tpu.matmul %5, %16, %cst_13 {dimension_numbers = #tpu.dot_dimension_numbers<[1], [0], [0], [1], [0, 0, 1, 1], [], []>, precision = #tpu.contract_precision<fp32>} : vector<64x16xf32>, vector<16x128xf32>, vector<64x128xf32> -> vector<64x128xf32>
    %18 = vector.extract_strided_slice %6 {offsets = [1, 0], sizes = [1, 128], strides = [1, 1]} : vector<2x128xf32> to vector<1x128xf32>
    %19 = vector.broadcast %18 : vector<1x128xf32> to vector<64x128xf32>
    %20 = arith.addf %17, %19 : vector<64x128xf32>
    %21 = vector.shape_cast %20 : vector<64x128xf32> to vector<8x8x128xf32>
    %c8 = arith.constant 8 : index
    %c0_14 = arith.constant 0 : index
    %c0_15 = arith.constant 0 : index
    %22 = vector.load %arg7[%c8, %c0_14, %c0_15] : memref<16x8x128xf32, #tpu.memory_space<vmem>>, vector<8x8x128xf32>
    tpu.vector_store %arg7[%c8, %c0_14, %c0_15], %21 {strides = array<i32>} : memref<16x8x128xf32, #tpu.memory_space<vmem>>, vector<8x8x128xf32>,
    %c0_16 = arith.constant 0 : index
    %c0_17 = arith.constant 0 : index
    %23 = vector.load %arg4[%c0_16, %c0_17] : memref<2x128xf32, #tpu.memory_space<vmem>>, vector<2x128xf32>
    %24 = vector.extract_strided_slice %23 {offsets = [0, 0], sizes = [1, 128], strides = [1, 1]} : vector<2x128xf32> to vector<1x128xf32>
    %25 = vector.extract_strided_slice %23 {offsets = [1, 0], sizes = [1, 128], strides = [1, 1]} : vector<2x128xf32> to vector<1x128xf32>
    %c0_18 = arith.constant 0 : index
    %c0_19 = arith.constant 0 : index
    %26 = vector.load %arg9[%c0_18, %c0_19] : memref<8x128xf32, #tpu.memory_space<vmem>>, vector<8x128xf32>
    %c0_i32_20 = arith.constant 0 : i32
    %27 = vector.broadcast %24 : vector<1x128xf32> to vector<8x128xf32>
    %28 = arith.mulf %26, %27 : vector<8x128xf32>
    %c0_i32_21 = arith.constant 0 : i32
    %29 = arith.addi %c0_i32_21, %c0_i32_20 : i32
    %30 = arith.index_cast %29 : i32 to index
    %c0_22 = arith.constant 0 : index
    %c0_23 = arith.constant 0 : index
    %31 = vector.load %arg7[%30, %c0_22, %c0_23] : memref<16x8x128xf32, #tpu.memory_space<vmem>>, vector<1x8x128xf32>
    %32 = vector.shape_cast %31 : vector<1x8x128xf32> to vector<8x128xf32>
    %33 = arith.addf %28, %32 : vector<8x128xf32>
    %cst_24 = arith.constant 0.000000e+00 : f32
    %34 = vector.broadcast %cst_24 : f32 to vector<8x128xf32>
    %35 = arith.maximumf %33, %34 : vector<8x128xf32>
    %36 = vector.broadcast %25 : vector<1x128xf32> to vector<8x128xf32>
    %37 = arith.mulf %35, %36 : vector<8x128xf32>
    %c8_i32 = arith.constant 8 : i32
    %38 = arith.addi %c8_i32, %c0_i32_20 : i32
    %39 = arith.index_cast %38 : i32 to index
    %c0_25 = arith.constant 0 : index
    %c0_26 = arith.constant 0 : index
    %40 = vector.load %arg7[%39, %c0_25, %c0_26] : memref<16x8x128xf32, #tpu.memory_space<vmem>>, vector<1x8x128xf32>
    %41 = vector.shape_cast %40 : vector<1x8x128xf32> to vector<8x128xf32>
    %42 = arith.addf %37, %41 : vector<8x128xf32>
    %cst_27 = arith.constant 0.000000e+00 : f32
    %43 = vector.broadcast %cst_27 : f32 to vector<8x128xf32>
    %44 = arith.maximumf %42, %43 : vector<8x128xf32>
    %45 = arith.index_cast %c0_i32_20 : i32 to index
    %c0_28 = arith.constant 0 : index
    %c0_29 = arith.constant 0 : index
    %46 = vector.load %arg8[%45, %c0_28, %c0_29] : memref<8x8x128xf32, #tpu.memory_space<vmem>>, vector<1x8x128xf32>
    %47 = vector.shape_cast %46 : vector<1x8x128xf32> to vector<8x128xf32>
    %48 = vector.shape_cast %44 : vector<8x128xf32> to vector<1x8x128xf32>
    tpu.vector_store %arg8[%45, %c0_28, %c0_29], %48 {strides = array<i32>} : memref<8x8x128xf32, #tpu.memory_space<vmem>>, vector<1x8x128xf32>,
    %c1_i32 = arith.constant 1 : i32
    %49 = vector.broadcast %24 : vector<1x128xf32> to vector<8x128xf32>
    %50 = arith.mulf %44, %49 : vector<8x128xf32>
    %c0_i32_30 = arith.constant 0 : i32
    %51 = arith.addi %c0_i32_30, %c1_i32 : i32
    %52 = arith.index_cast %51 : i32 to index
    %c0_31 = arith.constant 0 : index
    %c0_32 = arith.constant 0 : index
    %53 = vector.load %arg7[%52, %c0_31, %c0_32] : memref<16x8x128xf32, #tpu.memory_space<vmem>>, vector<1x8x128xf32>
    %54 = vector.shape_cast %53 : vector<1x8x128xf32> to vector<8x128xf32>
    %55 = arith.addf %50, %54 : vector<8x128xf32>
    %cst_33 = arith.constant 0.000000e+00 : f32
    %56 = vector.broadcast %cst_33 : f32 to vector<8x128xf32>
    %57 = arith.maximumf %55, %56 : vector<8x128xf32>
    %58 = vector.broadcast %25 : vector<1x128xf32> to vector<8x128xf32>
    %59 = arith.mulf %57, %58 : vector<8x128xf32>
    %c8_i32_34 = arith.constant 8 : i32
    %60 = arith.addi %c8_i32_34, %c1_i32 : i32
    %61 = arith.index_cast %60 : i32 to index
    %c0_35 = arith.constant 0 : index
    %c0_36 = arith.constant 0 : index
    %62 = vector.load %arg7[%61, %c0_35, %c0_36] : memref<16x8x128xf32, #tpu.memory_space<vmem>>, vector<1x8x128xf32>
    %63 = vector.shape_cast %62 : vector<1x8x128xf32> to vector<8x128xf32>
    %64 = arith.addf %59, %63 : vector<8x128xf32>
    %cst_37 = arith.constant 0.000000e+00 : f32
    %65 = vector.broadcast %cst_37 : f32 to vector<8x128xf32>
    %66 = arith.maximumf %64, %65 : vector<8x128xf32>
    %67 = arith.index_cast %c1_i32 : i32 to index
    %c0_38 = arith.constant 0 : index
    %c0_39 = arith.constant 0 : index
    %68 = vector.load %arg8[%67, %c0_38, %c0_39] : memref<8x8x128xf32, #tpu.memory_space<vmem>>, vector<1x8x128xf32>
    %69 = vector.shape_cast %68 : vector<1x8x128xf32> to vector<8x128xf32>
    %70 = vector.shape_cast %66 : vector<8x128xf32> to vector<1x8x128xf32>
    tpu.vector_store %arg8[%67, %c0_38, %c0_39], %70 {strides = array<i32>} : memref<8x8x128xf32, #tpu.memory_space<vmem>>, vector<1x8x128xf32>,
    %c2_i32 = arith.constant 2 : i32
    %71 = vector.broadcast %24 : vector<1x128xf32> to vector<8x128xf32>
    %72 = arith.mulf %66, %71 : vector<8x128xf32>
    %c0_i32_40 = arith.constant 0 : i32
    %73 = arith.addi %c0_i32_40, %c2_i32 : i32
    %74 = arith.index_cast %73 : i32 to index
    %c0_41 = arith.constant 0 : index
    %c0_42 = arith.constant 0 : index
    %75 = vector.load %arg7[%74, %c0_41, %c0_42] : memref<16x8x128xf32, #tpu.memory_space<vmem>>, vector<1x8x128xf32>
    %76 = vector.shape_cast %75 : vector<1x8x128xf32> to vector<8x128xf32>
    %77 = arith.addf %72, %76 : vector<8x128xf32>
    %cst_43 = arith.constant 0.000000e+00 : f32
    %78 = vector.broadcast %cst_43 : f32 to vector<8x128xf32>
    %79 = arith.maximumf %77, %78 : vector<8x128xf32>
    %80 = vector.broadcast %25 : vector<1x128xf32> to vector<8x128xf32>
    %81 = arith.mulf %79, %80 : vector<8x128xf32>
    %c8_i32_44 = arith.constant 8 : i32
    %82 = arith.addi %c8_i32_44, %c2_i32 : i32
    %83 = arith.index_cast %82 : i32 to index
    %c0_45 = arith.constant 0 : index
    %c0_46 = arith.constant 0 : index
    %84 = vector.load %arg7[%83, %c0_45, %c0_46] : memref<16x8x128xf32, #tpu.memory_space<vmem>>, vector<1x8x128xf32>
    %85 = vector.shape_cast %84 : vector<1x8x128xf32> to vector<8x128xf32>
    %86 = arith.addf %81, %85 : vector<8x128xf32>
    %cst_47 = arith.constant 0.000000e+00 : f32
    %87 = vector.broadcast %cst_47 : f32 to vector<8x128xf32>
    %88 = arith.maximumf %86, %87 : vector<8x128xf32>
    %89 = arith.index_cast %c2_i32 : i32 to index
    %c0_48 = arith.constant 0 : index
    %c0_49 = arith.constant 0 : index
    %90 = vector.load %arg8[%89, %c0_48, %c0_49] : memref<8x8x128xf32, #tpu.memory_space<vmem>>, vector<1x8x128xf32>
    %91 = vector.shape_cast %90 : vector<1x8x128xf32> to vector<8x128xf32>
    %92 = vector.shape_cast %88 : vector<8x128xf32> to vector<1x8x128xf32>
    tpu.vector_store %arg8[%89, %c0_48, %c0_49], %92 {strides = array<i32>} : memref<8x8x128xf32, #tpu.memory_space<vmem>>, vector<1x8x128xf32>,
    %c3_i32 = arith.constant 3 : i32
    %93 = vector.broadcast %24 : vector<1x128xf32> to vector<8x128xf32>
    %94 = arith.mulf %88, %93 : vector<8x128xf32>
    %c0_i32_50 = arith.constant 0 : i32
    %95 = arith.addi %c0_i32_50, %c3_i32 : i32
    %96 = arith.index_cast %95 : i32 to index
    %c0_51 = arith.constant 0 : index
    %c0_52 = arith.constant 0 : index
    %97 = vector.load %arg7[%96, %c0_51, %c0_52] : memref<16x8x128xf32, #tpu.memory_space<vmem>>, vector<1x8x128xf32>
    %98 = vector.shape_cast %97 : vector<1x8x128xf32> to vector<8x128xf32>
    %99 = arith.addf %94, %98 : vector<8x128xf32>
    %cst_53 = arith.constant 0.000000e+00 : f32
    %100 = vector.broadcast %cst_53 : f32 to vector<8x128xf32>
    %101 = arith.maximumf %99, %100 : vector<8x128xf32>
    %102 = vector.broadcast %25 : vector<1x128xf32> to vector<8x128xf32>
    %103 = arith.mulf %101, %102 : vector<8x128xf32>
    %c8_i32_54 = arith.constant 8 : i32
    %104 = arith.addi %c8_i32_54, %c3_i32 : i32
    %105 = arith.index_cast %104 : i32 to index
    %c0_55 = arith.constant 0 : index
    %c0_56 = arith.constant 0 : index
    %106 = vector.load %arg7[%105, %c0_55, %c0_56] : memref<16x8x128xf32, #tpu.memory_space<vmem>>, vector<1x8x128xf32>
    %107 = vector.shape_cast %106 : vector<1x8x128xf32> to vector<8x128xf32>
    %108 = arith.addf %103, %107 : vector<8x128xf32>
    %cst_57 = arith.constant 0.000000e+00 : f32
    %109 = vector.broadcast %cst_57 : f32 to vector<8x128xf32>
    %110 = arith.maximumf %108, %109 : vector<8x128xf32>
    %111 = arith.index_cast %c3_i32 : i32 to index
    %c0_58 = arith.constant 0 : index
    %c0_59 = arith.constant 0 : index
    %112 = vector.load %arg8[%111, %c0_58, %c0_59] : memref<8x8x128xf32, #tpu.memory_space<vmem>>, vector<1x8x128xf32>
    %113 = vector.shape_cast %112 : vector<1x8x128xf32> to vector<8x128xf32>
    %114 = vector.shape_cast %110 : vector<8x128xf32> to vector<1x8x128xf32>
    tpu.vector_store %arg8[%111, %c0_58, %c0_59], %114 {strides = array<i32>} : memref<8x8x128xf32, #tpu.memory_space<vmem>>, vector<1x8x128xf32>,
    %c4_i32 = arith.constant 4 : i32
    %115 = vector.broadcast %24 : vector<1x128xf32> to vector<8x128xf32>
    %116 = arith.mulf %110, %115 : vector<8x128xf32>
    %c0_i32_60 = arith.constant 0 : i32
    %117 = arith.addi %c0_i32_60, %c4_i32 : i32
    %118 = arith.index_cast %117 : i32 to index
    %c0_61 = arith.constant 0 : index
    %c0_62 = arith.constant 0 : index
    %119 = vector.load %arg7[%118, %c0_61, %c0_62] : memref<16x8x128xf32, #tpu.memory_space<vmem>>, vector<1x8x128xf32>
    %120 = vector.shape_cast %119 : vector<1x8x128xf32> to vector<8x128xf32>
    %121 = arith.addf %116, %120 : vector<8x128xf32>
    %cst_63 = arith.constant 0.000000e+00 : f32
    %122 = vector.broadcast %cst_63 : f32 to vector<8x128xf32>
    %123 = arith.maximumf %121, %122 : vector<8x128xf32>
    %124 = vector.broadcast %25 : vector<1x128xf32> to vector<8x128xf32>
    %125 = arith.mulf %123, %124 : vector<8x128xf32>
    %c8_i32_64 = arith.constant 8 : i32
    %126 = arith.addi %c8_i32_64, %c4_i32 : i32
    %127 = arith.index_cast %126 : i32 to index
    %c0_65 = arith.constant 0 : index
    %c0_66 = arith.constant 0 : index
    %128 = vector.load %arg7[%127, %c0_65, %c0_66] : memref<16x8x128xf32, #tpu.memory_space<vmem>>, vector<1x8x128xf32>
    %129 = vector.shape_cast %128 : vector<1x8x128xf32> to vector<8x128xf32>
    %130 = arith.addf %125, %129 : vector<8x128xf32>
    %cst_67 = arith.constant 0.000000e+00 : f32
    %131 = vector.broadcast %cst_67 : f32 to vector<8x128xf32>
    %132 = arith.maximumf %130, %131 : vector<8x128xf32>
    %133 = arith.index_cast %c4_i32 : i32 to index
    %c0_68 = arith.constant 0 : index
    %c0_69 = arith.constant 0 : index
    %134 = vector.load %arg8[%133, %c0_68, %c0_69] : memref<8x8x128xf32, #tpu.memory_space<vmem>>, vector<1x8x128xf32>
    %135 = vector.shape_cast %134 : vector<1x8x128xf32> to vector<8x128xf32>
    %136 = vector.shape_cast %132 : vector<8x128xf32> to vector<1x8x128xf32>
    tpu.vector_store %arg8[%133, %c0_68, %c0_69], %136 {strides = array<i32>} : memref<8x8x128xf32, #tpu.memory_space<vmem>>, vector<1x8x128xf32>,
    %c5_i32 = arith.constant 5 : i32
    %137 = vector.broadcast %24 : vector<1x128xf32> to vector<8x128xf32>
    %138 = arith.mulf %132, %137 : vector<8x128xf32>
    %c0_i32_70 = arith.constant 0 : i32
    %139 = arith.addi %c0_i32_70, %c5_i32 : i32
    %140 = arith.index_cast %139 : i32 to index
    %c0_71 = arith.constant 0 : index
    %c0_72 = arith.constant 0 : index
    %141 = vector.load %arg7[%140, %c0_71, %c0_72] : memref<16x8x128xf32, #tpu.memory_space<vmem>>, vector<1x8x128xf32>
    %142 = vector.shape_cast %141 : vector<1x8x128xf32> to vector<8x128xf32>
    %143 = arith.addf %138, %142 : vector<8x128xf32>
    %cst_73 = arith.constant 0.000000e+00 : f32
    %144 = vector.broadcast %cst_73 : f32 to vector<8x128xf32>
    %145 = arith.maximumf %143, %144 : vector<8x128xf32>
    %146 = vector.broadcast %25 : vector<1x128xf32> to vector<8x128xf32>
    %147 = arith.mulf %145, %146 : vector<8x128xf32>
    %c8_i32_74 = arith.constant 8 : i32
    %148 = arith.addi %c8_i32_74, %c5_i32 : i32
    %149 = arith.index_cast %148 : i32 to index
    %c0_75 = arith.constant 0 : index
    %c0_76 = arith.constant 0 : index
    %150 = vector.load %arg7[%149, %c0_75, %c0_76] : memref<16x8x128xf32, #tpu.memory_space<vmem>>, vector<1x8x128xf32>
    %151 = vector.shape_cast %150 : vector<1x8x128xf32> to vector<8x128xf32>
    %152 = arith.addf %147, %151 : vector<8x128xf32>
    %cst_77 = arith.constant 0.000000e+00 : f32
    %153 = vector.broadcast %cst_77 : f32 to vector<8x128xf32>
    %154 = arith.maximumf %152, %153 : vector<8x128xf32>
    %155 = arith.index_cast %c5_i32 : i32 to index
    %c0_78 = arith.constant 0 : index
    %c0_79 = arith.constant 0 : index
    %156 = vector.load %arg8[%155, %c0_78, %c0_79] : memref<8x8x128xf32, #tpu.memory_space<vmem>>, vector<1x8x128xf32>
    %157 = vector.shape_cast %156 : vector<1x8x128xf32> to vector<8x128xf32>
    %158 = vector.shape_cast %154 : vector<8x128xf32> to vector<1x8x128xf32>
    tpu.vector_store %arg8[%155, %c0_78, %c0_79], %158 {strides = array<i32>} : memref<8x8x128xf32, #tpu.memory_space<vmem>>, vector<1x8x128xf32>,
    %c6_i32 = arith.constant 6 : i32
    %159 = vector.broadcast %24 : vector<1x128xf32> to vector<8x128xf32>
    %160 = arith.mulf %154, %159 : vector<8x128xf32>
    %c0_i32_80 = arith.constant 0 : i32
    %161 = arith.addi %c0_i32_80, %c6_i32 : i32
    %162 = arith.index_cast %161 : i32 to index
    %c0_81 = arith.constant 0 : index
    %c0_82 = arith.constant 0 : index
    %163 = vector.load %arg7[%162, %c0_81, %c0_82] : memref<16x8x128xf32, #tpu.memory_space<vmem>>, vector<1x8x128xf32>
    %164 = vector.shape_cast %163 : vector<1x8x128xf32> to vector<8x128xf32>
    %165 = arith.addf %160, %164 : vector<8x128xf32>
    %cst_83 = arith.constant 0.000000e+00 : f32
    %166 = vector.broadcast %cst_83 : f32 to vector<8x128xf32>
    %167 = arith.maximumf %165, %166 : vector<8x128xf32>
    %168 = vector.broadcast %25 : vector<1x128xf32> to vector<8x128xf32>
    %169 = arith.mulf %167, %168 : vector<8x128xf32>
    %c8_i32_84 = arith.constant 8 : i32
    %170 = arith.addi %c8_i32_84, %c6_i32 : i32
    %171 = arith.index_cast %170 : i32 to index
    %c0_85 = arith.constant 0 : index
    %c0_86 = arith.constant 0 : index
    %172 = vector.load %arg7[%171, %c0_85, %c0_86] : memref<16x8x128xf32, #tpu.memory_space<vmem>>, vector<1x8x128xf32>
    %173 = vector.shape_cast %172 : vector<1x8x128xf32> to vector<8x128xf32>
    %174 = arith.addf %169, %173 : vector<8x128xf32>
    %cst_87 = arith.constant 0.000000e+00 : f32
    %175 = vector.broadcast %cst_87 : f32 to vector<8x128xf32>
    %176 = arith.maximumf %174, %175 : vector<8x128xf32>
    %177 = arith.index_cast %c6_i32 : i32 to index
    %c0_88 = arith.constant 0 : index
    %c0_89 = arith.constant 0 : index
    %178 = vector.load %arg8[%177, %c0_88, %c0_89] : memref<8x8x128xf32, #tpu.memory_space<vmem>>, vector<1x8x128xf32>
    %179 = vector.shape_cast %178 : vector<1x8x128xf32> to vector<8x128xf32>
    %180 = vector.shape_cast %176 : vector<8x128xf32> to vector<1x8x128xf32>
    tpu.vector_store %arg8[%177, %c0_88, %c0_89], %180 {strides = array<i32>} : memref<8x8x128xf32, #tpu.memory_space<vmem>>, vector<1x8x128xf32>,
    %c7_i32 = arith.constant 7 : i32
    %181 = vector.broadcast %24 : vector<1x128xf32> to vector<8x128xf32>
    %182 = arith.mulf %176, %181 : vector<8x128xf32>
    %c0_i32_90 = arith.constant 0 : i32
    %183 = arith.addi %c0_i32_90, %c7_i32 : i32
    %184 = arith.index_cast %183 : i32 to index
    %c0_91 = arith.constant 0 : index
    %c0_92 = arith.constant 0 : index
    %185 = vector.load %arg7[%184, %c0_91, %c0_92] : memref<16x8x128xf32, #tpu.memory_space<vmem>>, vector<1x8x128xf32>
    %186 = vector.shape_cast %185 : vector<1x8x128xf32> to vector<8x128xf32>
    %187 = arith.addf %182, %186 : vector<8x128xf32>
    %cst_93 = arith.constant 0.000000e+00 : f32
    %188 = vector.broadcast %cst_93 : f32 to vector<8x128xf32>
    %189 = arith.maximumf %187, %188 : vector<8x128xf32>
    %190 = vector.broadcast %25 : vector<1x128xf32> to vector<8x128xf32>
    %191 = arith.mulf %189, %190 : vector<8x128xf32>
    %c8_i32_94 = arith.constant 8 : i32
    %192 = arith.addi %c8_i32_94, %c7_i32 : i32
    %193 = arith.index_cast %192 : i32 to index
    %c0_95 = arith.constant 0 : index
    %c0_96 = arith.constant 0 : index
    %194 = vector.load %arg7[%193, %c0_95, %c0_96] : memref<16x8x128xf32, #tpu.memory_space<vmem>>, vector<1x8x128xf32>
    %195 = vector.shape_cast %194 : vector<1x8x128xf32> to vector<8x128xf32>
    %196 = arith.addf %191, %195 : vector<8x128xf32>
    %cst_97 = arith.constant 0.000000e+00 : f32
    %197 = vector.broadcast %cst_97 : f32 to vector<8x128xf32>
    %198 = arith.maximumf %196, %197 : vector<8x128xf32>
    %199 = arith.index_cast %c7_i32 : i32 to index
    %c0_98 = arith.constant 0 : index
    %c0_99 = arith.constant 0 : index
    %200 = vector.load %arg8[%199, %c0_98, %c0_99] : memref<8x8x128xf32, #tpu.memory_space<vmem>>, vector<1x8x128xf32>
    %201 = vector.shape_cast %200 : vector<1x8x128xf32> to vector<8x128xf32>
    %202 = vector.shape_cast %198 : vector<8x128xf32> to vector<1x8x128xf32>
    tpu.vector_store %arg8[%199, %c0_98, %c0_99], %202 {strides = array<i32>} : memref<8x8x128xf32, #tpu.memory_space<vmem>>, vector<1x8x128xf32>,
    %c8_i32_100 = arith.constant 8 : i32
    %c0_101 = arith.constant 0 : index
    %c0_102 = arith.constant 0 : index
    %203 = vector.load %arg9[%c0_101, %c0_102] : memref<8x128xf32, #tpu.memory_space<vmem>>, vector<8x128xf32>
    tpu.vector_store %arg9[%c0_101, %c0_102], %198 {strides = array<i32>} : memref<8x128xf32, #tpu.memory_space<vmem>>, vector<8x128xf32>,
    %c0_103 = arith.constant 0 : index
    %c0_104 = arith.constant 0 : index
    %c0_105 = arith.constant 0 : index
    %204 = vector.load %arg8[%c0_103, %c0_104, %c0_105] : memref<8x8x128xf32, #tpu.memory_space<vmem>>, vector<8x8x128xf32>
    %205 = tpu.transpose %204, [1, 0, 2] : vector<8x8x128xf32> -> vector<8x8x128xf32>
    %c0_106 = arith.constant 0 : index
    %c0_107 = arith.constant 0 : index
    %c0_108 = arith.constant 0 : index
    %206 = vector.load %arg6[%c0_106, %c0_107, %c0_108] : memref<8x8x128xf32, #tpu.memory_space<vmem>>, vector<8x8x128xf32>
    tpu.vector_store %arg6[%c0_106, %c0_107, %c0_108], %205 {strides = array<i32>} : memref<8x8x128xf32, #tpu.memory_space<vmem>>, vector<8x8x128xf32>,
    return
  }
  func.func @transform_0(%arg0: i32, %arg1: i32) -> (i32, i32, i32) {
    %c0_i32 = arith.constant 0 : i32
    %c0_i32_0 = arith.constant 0 : i32
    return %arg0, %arg1, %c0_i32 : i32, i32, i32
  }
  func.func @transform_1(%arg0: i32, %arg1: i32) -> (i32, i32, i32) {
    %c0_i32 = arith.constant 0 : i32
    %c0_i32_0 = arith.constant 0 : i32
    %c0_i32_1 = arith.constant 0 : i32
    %c0_i32_2 = arith.constant 0 : i32
    return %c0_i32, %c0_i32_0, %c0_i32_1 : i32, i32, i32
  }
  func.func @transform_2(%arg0: i32, %arg1: i32) -> (i32, i32) {
    %c0_i32 = arith.constant 0 : i32
    %c0_i32_0 = arith.constant 0 : i32
    %c0_i32_1 = arith.constant 0 : i32
    return %c0_i32, %c0_i32_0 : i32, i32
  }
  func.func @transform_3(%arg0: i32, %arg1: i32) -> (i32, i32) {
    %c0_i32 = arith.constant 0 : i32
    %c0_i32_0 = arith.constant 0 : i32
    %c0_i32_1 = arith.constant 0 : i32
    return %c0_i32, %c0_i32_0 : i32, i32
  }
  func.func @transform_4(%arg0: i32, %arg1: i32) -> (i32, i32, i32) {
    %c0_i32 = arith.constant 0 : i32
    %c0_i32_0 = arith.constant 0 : i32
    return %arg0, %arg1, %c0_i32 : i32, i32, i32
  }
}

</mosaic_0001>

<llo_original>
// kernel: tpu_custom_call.1
$region0: #{tpu_custom_call.1}
  #allocation0 [shape = 'u32[]', space=smem, size = 0x4, offset = 0x4, fixed_abs, tag = 'smem constant byte address 0x4 - core index']
  #allocation1 [shape = 'u32[72,128]{1,0:T(1,128)}', space=vmem, size = 0x9000, scoped, tag = 'internal scratch']
  #allocation2 [shape = 'f32[16,8,128]{2,1,0:T(8,128)}', space=vmem, size = 0x10000, scoped, tag = 'scratch operand']
  #allocation3 [shape = 'f32[8,8,128]{2,1,0:T(8,128)}', space=vmem, size = 0x8000, scoped, tag = 'scratch operand']
  #allocation4 [shape = 'f32[8,128]{1,0:T(8,128)}', space=vmem, size = 0x1000, scoped, tag = 'scratch operand']
  %s0 = inlined_call_operand.hbm [shape: f32[8,8,16], index: 0, kind: input, shape index: {}]
  %s1 = inlined_call_operand.hbm [shape: f32[2,16,128], index: 1, kind: input, shape index: {}]
  %s2 = inlined_call_operand.hbm [shape: f32[2,128], index: 2, kind: input, shape index: {}]
  %s3 = inlined_call_operand.vmem [shape: f32[2,128], index: 3, kind: input, shape index: {}]
  %s4 = inlined_call_operand.hbm [shape: f32[8,8,128], index: 4, kind: output, shape index: {}]
  %s5 = sld [smem:[#allocation0]]
  $region42: #{tpu_custom_call.1} parent=0
    _
  %s7 = ssub.s32 1, %s5
  %s8 = scalar_select 0, %s7, %s5
  $region1: #{tpu_custom_call.1} parent=0
    #allocation5 [shape = 'u8[32768]{0}', space=vmem, size = 0x8000, scoped, tag = 'input window, operand 0, single buffered']
    #allocation6 [shape = 's32[1]{0}', space=sflag, size = 0x4, scoped, tag = 'scoped memory for tpu_custom_call.1']
    #allocation7 [shape = 's32[1]{0}', space=sflag, size = 0x4, scoped, tag = 'scoped memory for tpu_custom_call.1']
    #allocation8 [shape = 'u8[16384]{0}', space=vmem, size = 0x4000, scoped, tag = 'input window, operand 1, single buffered']
    #allocation9 [shape = 's32[1]{0}', space=sflag, size = 0x4, scoped, tag = 'scoped memory for tpu_custom_call.1']
    #allocation10 [shape = 'u8[1024]{0}', space=vmem, size = 0x400, scoped, tag = 'input window, operand 2, single buffered']
    #allocation11 [shape = 'u8[32768]{0}', space=vmem, size = 0x8000, scoped, tag = 'output window, operand 0, single buffered']
    %9 = vsyncpa [#allocation6], 0
    %10 = vsyncpa [#allocation9], 0
    %11 = vsyncpa [#allocation7], 0
    // Predicated region
    $region2: #{tpu_custom_call.1} parent=1 // pred_check
      _
    $region3: #{tpu_custom_call.1} parent=1 // pred_check_branch
      %13 = sbr.rel (0) target = $region5
    $region4: #{tpu_custom_call.1} parent=1 // pred_region
      %15 = vsyncadd [#allocation6], 0
      %s16 = sshll.u32 %s0, 4
      %s17 = int_to_ptr.hbm [resolvable:$true] %s16
      %s18 = sshll.u32 [#allocation5], 4
      %s19 = int_to_ptr.vmem [resolvable:$true] %s18
      %24 = dma.hbm_to_vmem [thread:$0]  %s17, 1024, %s19, [#allocation6], 128, 128, 8
    $region5: #{tpu_custom_call.1} parent=1 // pred_fallthru
      _
    // Predicated region
    $region6: #{tpu_custom_call.1} parent=1 // pred_check
      _
    $region7: #{tpu_custom_call.1} parent=1 // pred_check_branch
      %26 = sbr.rel (0) target = $region9
    $region8: #{tpu_custom_call.1} parent=1 // pred_region
      %28 = vsyncadd [#allocation9], 0
      %s29 = sshll.u32 %s1, 4
      %s30 = int_to_ptr.hbm [resolvable:$true] %s29
      %s31 = sshll.u32 [#allocation8], 4
      %s32 = int_to_ptr.vmem [resolvable:$true] %s31
      %37 = dma.hbm_to_vmem [thread:$0]  %s30, 512, %s32, [#allocation9], 128, 128, 8
    $region9: #{tpu_custom_call.1} parent=1 // pred_fallthru
      _
    // Predicated region
    $region10: #{tpu_custom_call.1} parent=1 // pred_check
      _
    $region11: #{tpu_custom_call.1} parent=1 // pred_check_branch
      %39 = sbr.rel (0) target = $region13
    $region12: #{tpu_custom_call.1} parent=1 // pred_region
      %41 = vsyncadd [#allocation9], 0
      %s43 = sshll.u32 %s2, 4
      %s44 = int_to_ptr.hbm [resolvable:$true] %s43
      %s45 = sshll.u32 [#allocation10], 4
      %s46 = int_to_ptr.vmem [resolvable:$true] %s45
      %48 = dma.hbm_to_vmem [thread:$0]  %s44, 32, %s46, [#allocation9]
    $region13: #{tpu_custom_call.1} parent=1 // pred_fallthru
      _
    // Predicated region
    $region14: #{tpu_custom_call.1} parent=1 // pred_check
      _
    $region15: #{tpu_custom_call.1} parent=1 // pred_check_branch
      %50 = sbr.rel (0) target = $region17
    $region16: #{tpu_custom_call.1} parent=1 // pred_region
      _
    $region17: #{tpu_custom_call.1} parent=1 // pred_fallthru
      _
    // Predicated region
    $region18: #{tpu_custom_call.1} parent=1 // pred_check
      _
    $region19: #{tpu_custom_call.1} parent=1 // pred_check_branch
      %52 = sbr.rel (0) target = $region21
    $region20: #{tpu_custom_call.1} parent=1 // pred_region
      %54 = dma.done [#allocation6], 1024
    $region21: #{tpu_custom_call.1} parent=1 // pred_fallthru
      _
    // Predicated region
    $region22: #{tpu_custom_call.1} parent=1 // pred_check
      _
    $region23: #{tpu_custom_call.1} parent=1 // pred_check_branch
      %56 = sbr.rel (0) target = $region25
    $region24: #{tpu_custom_call.1} parent=1 // pred_region
      %58 = dma.done [#allocation9], 512
    $region25: #{tpu_custom_call.1} parent=1 // pred_fallthru
      _
    // Predicated region
    $region26: #{tpu_custom_call.1} parent=1 // pred_check
      _
    $region27: #{tpu_custom_call.1} parent=1 // pred_check_branch
      %60 = sbr.rel (0) target = $region29
    $region28: #{tpu_custom_call.1} parent=1 // pred_region
      %62 = dma.done [#allocation9], 32
    $region29: #{tpu_custom_call.1} parent=1 // pred_fallthru
      _
    %p63 = scmp.eq.s32.totalorder 0, 0
    // Predicated region
    $region30: #{tpu_custom_call.1} parent=1 // pred_check
      %p64 = pneg %p63
    $region31: #{tpu_custom_call.1} parent=1 // pred_check_branch
      %66 = sbr.rel (%p64) target = $region33
    $region32: #{tpu_custom_call.1} parent=1 // pred_region
      %67 = vst [vmem:[#allocation4] sm:$0xff] 1.0
    $region33: #{tpu_custom_call.1} parent=1 // pred_fallthru
      _
    %v68 = vld [vmem:[#allocation5] sm:$0xff]
    %v69 = vld [vmem:[#allocation5 + $0x8] sm:$0xff]
    %v70 = vld [vmem:[#allocation5 + $0x10] sm:$0xff]
    %v71 = vld [vmem:[#allocation5 + $0x18] sm:$0xff]
    %v72 = vld [vmem:[#allocation5 + $0x20] sm:$0xff]
    %v73 = vld [vmem:[#allocation5 + $0x28] sm:$0xff]
    %v74 = vld [vmem:[#allocation5 + $0x30] sm:$0xff]
    %v75 = vld [vmem:[#allocation5 + $0x38] sm:$0xff]
    %v76 = vrot.slane %v70, 4
    %vm77 = vcmask 1047556
    %v78 = vsel %vm77, %v76, %v68
    %v79 = vrot.slane %v68, 4
    %v80 = vsel %vm77, %v70, %v79
    %v82 = vunpack.c.l.s4 1983009808
    %v83 = vunpack.c.0.s8 %v82
    %v84 = vperm.slane %v78, %v83
    %v86 = vunpack.c.l.s4 1983009808
    %v87 = vunpack.c.0.s8 %v86
    %v88 = vperm.slane %v80, %v87
    %v89 = vrot.slane %v71, 4
    %v90 = vsel %vm77, %v89, %v69
    %v91 = vrot.slane %v69, 4
    %v92 = vsel %vm77, %v71, %v91
    %v94 = vunpack.c.l.s4 1983009808
    %v95 = vunpack.c.0.s8 %v94
    %v96 = vperm.slane %v90, %v95
    %v98 = vunpack.c.l.s4 1983009808
    %v99 = vunpack.c.0.s8 %v98
    %v100 = vperm.slane %v92, %v99
    %v101 = vrot.slane %v74, 4
    %v102 = vsel %vm77, %v101, %v72
    %v103 = vrot.slane %v72, 4
    %v104 = vsel %vm77, %v74, %v103
    %v106 = vunpack.c.l.s4 1983009808
    %v107 = vunpack.c.0.s8 %v106
    %v108 = vperm.slane %v102, %v107
    %v110 = vunpack.c.l.s4 1983009808
    %v111 = vunpack.c.0.s8 %v110
    %v112 = vperm.slane %v104, %v111
    %v113 = vrot.slane %v75, 4
    %v114 = vsel %vm77, %v113, %v73
    %v115 = vrot.slane %v73, 4
    %v116 = vsel %vm77, %v75, %v115
    %v118 = vunpack.c.l.s4 1983009808
    %v119 = vunpack.c.0.s8 %v118
    %v120 = vperm.slane %v114, %v119
    %v122 = vunpack.c.l.s4 1983009808
    %v123 = vunpack.c.0.s8 %v122
    %v124 = vperm.slane %v116, %v123
    %v125 = vrot.slane %v96, 4
    %v126 = vsel %vm77, %v125, %v84
    %v127 = vrot.slane %v84, 4
    %v128 = vsel %vm77, %v96, %v127
    %v130 = vunpack.c.l.s4 1934713408
    %v131 = vunpack.c.0.s8 %v130
    %v132 = vperm.slane %v126, %v131
    %v134 = vunpack.c.l.s4 1934713408
    %v135 = vunpack.c.0.s8 %v134
    %v136 = vperm.slane %v128, %v135
    %v137 = vrot.slane %v100, 4
    %v138 = vsel %vm77, %v137, %v88
    %v139 = vrot.slane %v88, 4
    %v140 = vsel %vm77, %v100, %v139
    %v142 = vunpack.c.l.s4 1934713408
    %v143 = vunpack.c.0.s8 %v142
    %v144 = vperm.slane %v138, %v143
    %v146 = vunpack.c.l.s4 1934713408
    %v147 = vunpack.c.0.s8 %v146
    %v148 = vperm.slane %v140, %v147
    %v149 = vrot.slane %v120, 4
    %v150 = vsel %vm77, %v149, %v108
    %v151 = vrot.slane %v108, 4
    %v152 = vsel %vm77, %v120, %v151
    %v154 = vunpack.c.l.s4 1934713408
    %v155 = vunpack.c.0.s8 %v154
    %v156 = vperm.slane %v150, %v155
    %v158 = vunpack.c.l.s4 1934713408
    %v159 = vunpack.c.0.s8 %v158
    %v160 = vperm.slane %v152, %v159
    %v161 = vrot.slane %v124, 4
    %v162 = vsel %vm77, %v161, %v112
    %v163 = vrot.slane %v112, 4
    %v164 = vsel %vm77, %v124, %v163
    %v166 = vunpack.c.l.s4 1934713408
    %v167 = vunpack.c.0.s8 %v166
    %v168 = vperm.slane %v162, %v167
    %v170 = vunpack.c.l.s4 1934713408
    %v171 = vunpack.c.0.s8 %v170
    %v172 = vperm.slane %v164, %v171
    %v173 = vrot.slane %v156, 4
    %v174 = vsel %vm77, %v173, %v132
    %v175 = vrot.slane %v132, 4
    %v176 = vsel %vm77, %v156, %v175
    %v177 = vrot.slane %v160, 4
    %v178 = vsel %vm77, %v177, %v136
    %v179 = vrot.slane %v136, 4
    %v180 = vsel %vm77, %v160, %v179
    %v181 = vrot.slane %v168, 4
    %v182 = vsel %vm77, %v181, %v144
    %v183 = vrot.slane %v144, 4
    %v184 = vsel %vm77, %v168, %v183
    %v185 = vrot.slane %v172, 4
    %v186 = vsel %vm77, %v185, %v148
    %v187 = vrot.slane %v148, 4
    %v188 = vsel %vm77, %v172, %v187
    %v189 = vld [vmem:[%s3] sm:$0x3]
    %v190 = vld [vmem:[#allocation8] sm:$0xff]
    %v191 = vld [vmem:[#allocation8 + $0x8] sm:$0xff]
    %v192 = vperm.slane %v189, 0
    %vm193 = vcmask 130048
    %v195 = vsel %vm193, %v174, 0
    %v198 = vsel %vm193, %v176, 0
    %v201 = vsel %vm193, %v178, 0
    %v204 = vsel %vm193, %v180, 0
    %v207 = vsel %vm193, %v182, 0
    %v210 = vsel %vm193, %v184, 0
    %v213 = vsel %vm193, %v186, 0
    %v216 = vsel %vm193, %v188, 0
    %218 = vmatpush.msra.mxu0 0.0
    %219 = vmatpush.msra.mxu0 0.0
    %220 = vmatpush.msra.mxu0 0.0
    %221 = vmatpush.msra.mxu0 0.0
    %222 = vmatpush.msra.mxu0 0.0
    %223 = vmatpush.msra.mxu0 0.0
    %224 = vmatpush.msra.mxu0 0.0
    %225 = vmatpush.msra.mxu0 0.0
    %226 = vmatpush.msra.mxu0 0.0
    %227 = vmatpush.msra.mxu0 0.0
    %228 = vmatpush.msra.mxu0 0.0
    %229 = vmatpush.msra.mxu0 0.0
    %230 = vmatpush.msra.mxu0 0.0
    %231 = vmatpush.msra.mxu0 0.0
    %v232 = vand.u32 %v191, 4294901760
    %233 = vmatpush.msra.mxu0 %v232
    %v234 = vand.u32 %v190, 4294901760
    %235 = vmatpush.msra.mxu0 %v234
    %v236 = vand.u32 %v195, 4294901760
    %v237 = vsub.f32 %v195, %v236
    %v238 = vand.u32 %v237, 4294901760
    %v239 = vsub.f32 %v237, %v238
    %v240 = vand.u32 %v239, 4294901760
    %241 = vmatmul.f32.gmra.mxu0 %v240
    %v242 = vpop.f32.mrf.mxu0
    %v243 = vadd.f32 %v192, %v242
    %v244 = vand.u32 %v198, 4294901760
    %v245 = vsub.f32 %v198, %v244
    %v246 = vand.u32 %v245, 4294901760
    %v247 = vsub.f32 %v245, %v246
    %v248 = vand.u32 %v247, 4294901760
    %249 = vmatmul.f32.gmra.mxu0 %v248
    %v250 = vpop.f32.mrf.mxu0
    %v251 = vadd.f32 %v192, %v250
    %v252 = vand.u32 %v201, 4294901760
    %v253 = vsub.f32 %v201, %v252
    %v254 = vand.u32 %v253, 4294901760
    %v255 = vsub.f32 %v253, %v254
    %v256 = vand.u32 %v255, 4294901760
    %257 = vmatmul.f32.gmra.mxu0 %v256
    %v258 = vpop.f32.mrf.mxu0
    %v259 = vadd.f32 %v192, %v258
    %v260 = vand.u32 %v204, 4294901760
    %v261 = vsub.f32 %v204, %v260
    %v262 = vand.u32 %v261, 4294901760
    %v263 = vsub.f32 %v261, %v262
    %v264 = vand.u32 %v263, 4294901760
    %265 = vmatmul.f32.gmra.mxu0 %v264
    %v266 = vpop.f32.mrf.mxu0
    %v267 = vadd.f32 %v192, %v266
    %v268 = vand.u32 %v207, 4294901760
    %v269 = vsub.f32 %v207, %v268
    %v270 = vand.u32 %v269, 4294901760
    %v271 = vsub.f32 %v269, %v270
    %v272 = vand.u32 %v271, 4294901760
    %273 = vmatmul.f32.gmra.mxu0 %v272
    %v274 = vpop.f32.mrf.mxu0
    %v275 = vadd.f32 %v192, %v274
    %v276 = vand.u32 %v210, 4294901760
    %v277 = vsub.f32 %v210, %v276
    %v278 = vand.u32 %v277, 4294901760
    %v279 = vsub.f32 %v277, %v278
    %v280 = vand.u32 %v279, 4294901760
    %281 = vmatmul.f32.gmra.mxu0 %v280
    %v282 = vpop.f32.mrf.mxu0
    %v283 = vadd.f32 %v192, %v282
    %v284 = vand.u32 %v213, 4294901760
    %v285 = vsub.f32 %v213, %v284
    %v286 = vand.u32 %v285, 4294901760
    %v287 = vsub.f32 %v285, %v286
    %v288 = vand.u32 %v287, 4294901760
    %289 = vmatmul.f32.gmra.mxu0 %v288
    %v290 = vpop.f32.mrf.mxu0
    %v291 = vadd.f32 %v192, %v290
    %v292 = vand.u32 %v216, 4294901760
    %v293 = vsub.f32 %v216, %v292
    %v294 = vand.u32 %v293, 4294901760
    %v295 = vsub.f32 %v293, %v294
    %v296 = vand.u32 %v295, 4294901760
    %297 = vmatmul.f32.gmra.mxu0 %v296
    %v298 = vpop.f32.mrf.mxu0
    %v299 = vadd.f32 %v192, %v298
    %300 = vdwg.mxu0
    %301 = vmatpush.msra.mxu0 0.0
    %302 = vmatpush.msra.mxu0 0.0
    %303 = vmatpush.msra.mxu0 0.0
    %304 = vmatpush.msra.mxu0 0.0
    %305 = vmatpush.msra.mxu0 0.0
    %306 = vmatpush.msra.mxu0 0.0
    %307 = vmatpush.msra.mxu0 0.0
    %308 = vmatpush.msra.mxu0 0.0
    %309 = vmatpush.msra.mxu0 0.0
    %310 = vmatpush.msra.mxu0 0.0
    %311 = vmatpush.msra.mxu0 0.0
    %312 = vmatpush.msra.mxu0 0.0
    %313 = vmatpush.msra.mxu0 0.0
    %314 = vmatpush.msra.mxu0 0.0
    %v315 = vand.u32 %v191, 4294901760
    %v316 = vsub.f32 %v191, %v315
    %v317 = vand.u32 %v316, 4294901760
    %v318 = vsub.f32 %v316, %v317
    %v319 = vand.u32 %v318, 4294901760
    %320 = vmatpush.msra.mxu0 %v319
    %v321 = vand.u32 %v190, 4294901760
    %v322 = vsub.f32 %v190, %v321
    %v323 = vand.u32 %v322, 4294901760
    %v324 = vsub.f32 %v322, %v323
    %v325 = vand.u32 %v324, 4294901760
    %326 = vmatpush.msra.mxu0 %v325
    %v327 = vand.u32 %v195, 4294901760
    %328 = vmatmul.f32.gmra.mxu0 %v327
    %v329 = vpop.f32.mrf.mxu0
    %v330 = vadd.f32 %v243, %v329
    %v331 = vand.u32 %v198, 4294901760
    %332 = vmatmul.f32.gmra.mxu0 %v331
    %v333 = vpop.f32.mrf.mxu0
    %v334 = vadd.f32 %v251, %v333
    %v335 = vand.u32 %v201, 4294901760
    %336 = vmatmul.f32.gmra.mxu0 %v335
    %v337 = vpop.f32.mrf.mxu0
    %v338 = vadd.f32 %v259, %v337
    %v339 = vand.u32 %v204, 4294901760
    %340 = vmatmul.f32.gmra.mxu0 %v339
    %v341 = vpop.f32.mrf.mxu0
    %v342 = vadd.f32 %v267, %v341
    %v343 = vand.u32 %v207, 4294901760
    %344 = vmatmul.f32.gmra.mxu0 %v343
    %v345 = vpop.f32.mrf.mxu0
    %v346 = vadd.f32 %v275, %v345
    %v347 = vand.u32 %v210, 4294901760
    %348 = vmatmul.f32.gmra.mxu0 %v347
    %v349 = vpop.f32.mrf.mxu0
    %v350 = vadd.f32 %v283, %v349
    %v351 = vand.u32 %v213, 4294901760
    %352 = vmatmul.f32.gmra.mxu0 %v351
    %v353 = vpop.f32.mrf.mxu0
    %v354 = vadd.f32 %v291, %v353
    %v355 = vand.u32 %v216, 4294901760
    %356 = vmatmul.f32.gmra.mxu0 %v355
    %v357 = vpop.f32.mrf.mxu0
    %v358 = vadd.f32 %v299, %v357
    %359 = vdwg.mxu0
    %360 = vmatpush.msra.mxu0 0.0
    %361 = vmatpush.msra.mxu0 0.0
    %362 = vmatpush.msra.mxu0 0.0
    %363 = vmatpush.msra.mxu0 0.0
    %364 = vmatpush.msra.mxu0 0.0
    %365 = vmatpush.msra.mxu0 0.0
    %366 = vmatpush.msra.mxu0 0.0
    %367 = vmatpush.msra.mxu0 0.0
    %368 = vmatpush.msra.mxu0 0.0
    %369 = vmatpush.msra.mxu0 0.0
    %370 = vmatpush.msra.mxu0 0.0
    %371 = vmatpush.msra.mxu0 0.0
    %372 = vmatpush.msra.mxu0 0.0
    %373 = vmatpush.msra.mxu0 0.0
    %v374 = vand.u32 %v191, 4294901760
    %v375 = vsub.f32 %v191, %v374
    %376 = vmatpush.msra.mxu0 %v375
    %v377 = vand.u32 %v190, 4294901760
    %v378 = vsub.f32 %v190, %v377
    %379 = vmatpush.msra.mxu0 %v378
    %v380 = vand.u32 %v195, 4294901760
    %v381 = vsub.f32 %v195, %v380
    %382 = vmatmul.f32.gmra.mxu0 %v381
    %v383 = vpop.f32.mrf.mxu0
    %v384 = vadd.f32 %v330, %v383
    %v385 = vand.u32 %v198, 4294901760
    %v386 = vsub.f32 %v198, %v385
    %387 = vmatmul.f32.gmra.mxu0 %v386
    %v388 = vpop.f32.mrf.mxu0
    %v389 = vadd.f32 %v334, %v388
    %v390 = vand.u32 %v201, 4294901760
    %v391 = vsub.f32 %v201, %v390
    %392 = vmatmul.f32.gmra.mxu0 %v391
    %v393 = vpop.f32.mrf.mxu0
    %v394 = vadd.f32 %v338, %v393
    %v395 = vand.u32 %v204, 4294901760
    %v396 = vsub.f32 %v204, %v395
    %397 = vmatmul.f32.gmra.mxu0 %v396
    %v398 = vpop.f32.mrf.mxu0
    %v399 = vadd.f32 %v342, %v398
    %v400 = vand.u32 %v207, 4294901760
    %v401 = vsub.f32 %v207, %v400
    %402 = vmatmul.f32.gmra.mxu0 %v401
    %v403 = vpop.f32.mrf.mxu0
    %v404 = vadd.f32 %v346, %v403
    %v405 = vand.u32 %v210, 4294901760
    %v406 = vsub.f32 %v210, %v405
    %407 = vmatmul.f32.gmra.mxu0 %v406
    %v408 = vpop.f32.mrf.mxu0
    %v409 = vadd.f32 %v350, %v408
    %v410 = vand.u32 %v213, 4294901760
    %v411 = vsub.f32 %v213, %v410
    %412 = vmatmul.f32.gmra.mxu0 %v411
    %v413 = vpop.f32.mrf.mxu0
    %v414 = vadd.f32 %v354, %v413
    %v415 = vand.u32 %v216, 4294901760
    %v416 = vsub.f32 %v216, %v415
    %417 = vmatmul.f32.gmra.mxu0 %v416
    %v418 = vpop.f32.mrf.mxu0
    %v419 = vadd.f32 %v358, %v418
    %420 = vdwg.mxu0
    %421 = vmatpush.msra.mxu0 0.0
    %422 = vmatpush.msra.mxu0 0.0
    %423 = vmatpush.msra.mxu0 0.0
    %424 = vmatpush.msra.mxu0 0.0
    %425 = vmatpush.msra.mxu0 0.0
    %426 = vmatpush.msra.mxu0 0.0
    %427 = vmatpush.msra.mxu0 0.0
    %428 = vmatpush.msra.mxu0 0.0
    %429 = vmatpush.msra.mxu0 0.0
    %430 = vmatpush.msra.mxu0 0.0
    %431 = vmatpush.msra.mxu0 0.0
    %432 = vmatpush.msra.mxu0 0.0
    %433 = vmatpush.msra.mxu0 0.0
    %434 = vmatpush.msra.mxu0 0.0
    %v435 = vand.u32 %v191, 4294901760
    %436 = vmatpush.msra.mxu0 %v435
    %v437 = vand.u32 %v190, 4294901760
    %438 = vmatpush.msra.mxu0 %v437
    %v439 = vand.u32 %v195, 4294901760
    %v440 = vsub.f32 %v195, %v439
    %v441 = vand.u32 %v440, 4294901760
    %442 = vmatmul.f32.gmra.mxu0 %v441
    %v443 = vpop.f32.mrf.mxu0
    %v444 = vadd.f32 %v384, %v443
    %v445 = vand.u32 %v198, 4294901760
    %v446 = vsub.f32 %v198, %v445
    %v447 = vand.u32 %v446, 4294901760
    %448 = vmatmul.f32.gmra.mxu0 %v447
    %v449 = vpop.f32.mrf.mxu0
    %v450 = vadd.f32 %v389, %v449
    %v451 = vand.u32 %v201, 4294901760
    %v452 = vsub.f32 %v201, %v451
    %v453 = vand.u32 %v452, 4294901760
    %454 = vmatmul.f32.gmra.mxu0 %v453
    %v455 = vpop.f32.mrf.mxu0
    %v456 = vadd.f32 %v394, %v455
    %v457 = vand.u32 %v204, 4294901760
    %v458 = vsub.f32 %v204, %v457
    %v459 = vand.u32 %v458, 4294901760
    %460 = vmatmul.f32.gmra.mxu0 %v459
    %v461 = vpop.f32.mrf.mxu0
    %v462 = vadd.f32 %v399, %v461
    %v463 = vand.u32 %v207, 4294901760
    %v464 = vsub.f32 %v207, %v463
    %v465 = vand.u32 %v464, 4294901760
    %466 = vmatmul.f32.gmra.mxu0 %v465
    %v467 = vpop.f32.mrf.mxu0
    %v468 = vadd.f32 %v404, %v467
    %v469 = vand.u32 %v210, 4294901760
    %v470 = vsub.f32 %v210, %v469
    %v471 = vand.u32 %v470, 4294901760
    %472 = vmatmul.f32.gmra.mxu0 %v471
    %v473 = vpop.f32.mrf.mxu0
    %v474 = vadd.f32 %v409, %v473
    %v475 = vand.u32 %v213, 4294901760
    %v476 = vsub.f32 %v213, %v475
    %v477 = vand.u32 %v476, 4294901760
    %478 = vmatmul.f32.gmra.mxu0 %v477
    %v479 = vpop.f32.mrf.mxu0
    %v480 = vadd.f32 %v414, %v479
    %v481 = vand.u32 %v216, 4294901760
    %v482 = vsub.f32 %v216, %v481
    %v483 = vand.u32 %v482, 4294901760
    %484 = vmatmul.f32.gmra.mxu0 %v483
    %v485 = vpop.f32.mrf.mxu0
    %v486 = vadd.f32 %v419, %v485
    %487 = vdwg.mxu0
    %488 = vmatpush.msra.mxu0 0.0
    %489 = vmatpush.msra.mxu0 0.0
    %490 = vmatpush.msra.mxu0 0.0
    %491 = vmatpush.msra.mxu0 0.0
    %492 = vmatpush.msra.mxu0 0.0
    %493 = vmatpush.msra.mxu0 0.0
    %494 = vmatpush.msra.mxu0 0.0
    %495 = vmatpush.msra.mxu0 0.0
    %496 = vmatpush.msra.mxu0 0.0
    %497 = vmatpush.msra.mxu0 0.0
    %498 = vmatpush.msra.mxu0 0.0
    %499 = vmatpush.msra.mxu0 0.0
    %500 = vmatpush.msra.mxu0 0.0
    %501 = vmatpush.msra.mxu0 0.0
    %v502 = vand.u32 %v191, 4294901760
    %v503 = vsub.f32 %v191, %v502
    %v504 = vand.u32 %v503, 4294901760
    %505 = vmatpush.msra.mxu0 %v504
    %v506 = vand.u32 %v190, 4294901760
    %v507 = vsub.f32 %v190, %v506
    %v508 = vand.u32 %v507, 4294901760
    %509 = vmatpush.msra.mxu0 %v508
    %v510 = vand.u32 %v195, 4294901760
    %511 = vmatmul.f32.gmra.mxu0 %v510
    %v512 = vpop.f32.mrf.mxu0
    %v513 = vadd.f32 %v444, %v512
    %v514 = vand.u32 %v198, 4294901760
    %515 = vmatmul.f32.gmra.mxu0 %v514
    %v516 = vpop.f32.mrf.mxu0
    %v517 = vadd.f32 %v450, %v516
    %v518 = vand.u32 %v201, 4294901760
    %519 = vmatmul.f32.gmra.mxu0 %v518
    %v520 = vpop.f32.mrf.mxu0
    %v521 = vadd.f32 %v456, %v520
    %v522 = vand.u32 %v204, 4294901760
    %523 = vmatmul.f32.gmra.mxu0 %v522
    %v524 = vpop.f32.mrf.mxu0
    %v525 = vadd.f32 %v462, %v524
    %v526 = vand.u32 %v207, 4294901760
    %527 = vmatmul.f32.gmra.mxu0 %v526
    %v528 = vpop.f32.mrf.mxu0
    %v529 = vadd.f32 %v468, %v528
    %v530 = vand.u32 %v210, 4294901760
    %531 = vmatmul.f32.gmra.mxu0 %v530
    %v532 = vpop.f32.mrf.mxu0
    %v533 = vadd.f32 %v474, %v532
    %v534 = vand.u32 %v213, 4294901760
    %535 = vmatmul.f32.gmra.mxu0 %v534
    %v536 = vpop.f32.mrf.mxu0
    %v537 = vadd.f32 %v480, %v536
    %v538 = vand.u32 %v216, 4294901760
    %539 = vmatmul.f32.gmra.mxu0 %v538
    %v540 = vpop.f32.mrf.mxu0
    %v541 = vadd.f32 %v486, %v540
    %542 = vdwg.mxu0
    %543 = vmatpush.msra.mxu0 0.0
    %544 = vmatpush.msra.mxu0 0.0
    %545 = vmatpush.msra.mxu0 0.0
    %546 = vmatpush.msra.mxu0 0.0
    %547 = vmatpush.msra.mxu0 0.0
    %548 = vmatpush.msra.mxu0 0.0
    %549 = vmatpush.msra.mxu0 0.0
    %550 = vmatpush.msra.mxu0 0.0
    %551 = vmatpush.msra.mxu0 0.0
    %552 = vmatpush.msra.mxu0 0.0
    %553 = vmatpush.msra.mxu0 0.0
    %554 = vmatpush.msra.mxu0 0.0
    %555 = vmatpush.msra.mxu0 0.0
    %556 = vmatpush.msra.mxu0 0.0
    %v557 = vand.u32 %v191, 4294901760
    %558 = vmatpush.msra.mxu0 %v557
    %v559 = vand.u32 %v190, 4294901760
    %560 = vmatpush.msra.mxu0 %v559
    %v561 = vand.u32 %v195, 4294901760
    %562 = vmatmul.f32.gmra.mxu0 %v561
    %v563 = vpop.f32.mrf.mxu0
    %v564 = vadd.f32 %v513, %v563
    %v565 = vand.u32 %v198, 4294901760
    %566 = vmatmul.f32.gmra.mxu0 %v565
    %v567 = vpop.f32.mrf.mxu0
    %v568 = vadd.f32 %v517, %v567
    %v569 = vand.u32 %v201, 4294901760
    %570 = vmatmul.f32.gmra.mxu0 %v569
    %v571 = vpop.f32.mrf.mxu0
    %v572 = vadd.f32 %v521, %v571
    %v573 = vand.u32 %v204, 4294901760
    %574 = vmatmul.f32.gmra.mxu0 %v573
    %v575 = vpop.f32.mrf.mxu0
    %v576 = vadd.f32 %v525, %v575
    %v577 = vand.u32 %v207, 4294901760
    %578 = vmatmul.f32.gmra.mxu0 %v577
    %v579 = vpop.f32.mrf.mxu0
    %v580 = vadd.f32 %v529, %v579
    %v581 = vand.u32 %v210, 4294901760
    %582 = vmatmul.f32.gmra.mxu0 %v581
    %v583 = vpop.f32.mrf.mxu0
    %v584 = vadd.f32 %v533, %v583
    %v585 = vand.u32 %v213, 4294901760
    %586 = vmatmul.f32.gmra.mxu0 %v585
    %v587 = vpop.f32.mrf.mxu0
    %v588 = vadd.f32 %v537, %v587
    %v589 = vand.u32 %v216, 4294901760
    %590 = vmatmul.f32.gmra.mxu0 %v589
    %v591 = vpop.f32.mrf.mxu0
    %v592 = vadd.f32 %v541, %v591
    %593 = vdwg.mxu0
    %594 = vst [vmem:[#allocation2] sm:$0xff] %v564
    %595 = vst [vmem:[#allocation2 + $0x8] sm:$0xff] %v568
    %596 = vst [vmem:[#allocation2 + $0x10] sm:$0xff] %v572
    %597 = vst [vmem:[#allocation2 + $0x18] sm:$0xff] %v576
    %598 = vst [vmem:[#allocation2 + $0x20] sm:$0xff] %v580
    %599 = vst [vmem:[#allocation2 + $0x28] sm:$0xff] %v584
    %600 = vst [vmem:[#allocation2 + $0x30] sm:$0xff] %v588
    %601 = vst [vmem:[#allocation2 + $0x38] sm:$0xff] %v592
    %s602 = scalar_lea.vmem [#allocation8], 16
    %v603 = vld [vmem:[%s602] sm:$0xff]
    %v604 = vld [vmem:[%s602 + $0x8] sm:$0xff]
    %v605 = vperm.slane %v189, 1
    %606 = vmatpush.msra.mxu0 0.0
    %607 = vmatpush.msra.mxu0 0.0
    %608 = vmatpush.msra.mxu0 0.0
    %609 = vmatpush.msra.mxu0 0.0
    %610 = vmatpush.msra.mxu0 0.0
    %611 = vmatpush.msra.mxu0 0.0
    %612 = vmatpush.msra.mxu0 0.0
    %613 = vmatpush.msra.mxu0 0.0
    %614 = vmatpush.msra.mxu0 0.0
    %615 = vmatpush.msra.mxu0 0.0
    %616 = vmatpush.msra.mxu0 0.0
    %617 = vmatpush.msra.mxu0 0.0
    %618 = vmatpush.msra.mxu0 0.0
    %619 = vmatpush.msra.mxu0 0.0
    %v620 = vand.u32 %v604, 4294901760
    %621 = vmatpush.msra.mxu0 %v620
    %v622 = vand.u32 %v603, 4294901760
    %623 = vmatpush.msra.mxu0 %v622
    %v624 = vand.u32 %v195, 4294901760
    %v625 = vsub.f32 %v195, %v624
    %v626 = vand.u32 %v625, 4294901760
    %v627 = vsub.f32 %v625, %v626
    %v628 = vand.u32 %v627, 4294901760
    %629 = vmatmul.f32.gmra.mxu0 %v628
    %v630 = vpop.f32.mrf.mxu0
    %v631 = vadd.f32 %v605, %v630
    %v632 = vand.u32 %v198, 4294901760
    %v633 = vsub.f32 %v198, %v632
    %v634 = vand.u32 %v633, 4294901760
    %v635 = vsub.f32 %v633, %v634
    %v636 = vand.u32 %v635, 4294901760
    %637 = vmatmul.f32.gmra.mxu0 %v636
    %v638 = vpop.f32.mrf.mxu0
    %v639 = vadd.f32 %v605, %v638
    %v640 = vand.u32 %v201, 4294901760
    %v641 = vsub.f32 %v201, %v640
    %v642 = vand.u32 %v641, 4294901760
    %v643 = vsub.f32 %v641, %v642
    %v644 = vand.u32 %v643, 4294901760
    %645 = vmatmul.f32.gmra.mxu0 %v644
    %v646 = vpop.f32.mrf.mxu0
    %v647 = vadd.f32 %v605, %v646
    %v648 = vand.u32 %v204, 4294901760
    %v649 = vsub.f32 %v204, %v648
    %v650 = vand.u32 %v649, 4294901760
    %v651 = vsub.f32 %v649, %v650
    %v652 = vand.u32 %v651, 4294901760
    %653 = vmatmul.f32.gmra.mxu0 %v652
    %v654 = vpop.f32.mrf.mxu0
    %v655 = vadd.f32 %v605, %v654
    %v656 = vand.u32 %v207, 4294901760
    %v657 = vsub.f32 %v207, %v656
    %v658 = vand.u32 %v657, 4294901760
    %v659 = vsub.f32 %v657, %v658
    %v660 = vand.u32 %v659, 4294901760
    %661 = vmatmul.f32.gmra.mxu0 %v660
    %v662 = vpop.f32.mrf.mxu0
    %v663 = vadd.f32 %v605, %v662
    %v664 = vand.u32 %v210, 4294901760
    %v665 = vsub.f32 %v210, %v664
    %v666 = vand.u32 %v665, 4294901760
    %v667 = vsub.f32 %v665, %v666
    %v668 = vand.u32 %v667, 4294901760
    %669 = vmatmul.f32.gmra.mxu0 %v668
    %v670 = vpop.f32.mrf.mxu0
    %v671 = vadd.f32 %v605, %v670
    %v672 = vand.u32 %v213, 4294901760
    %v673 = vsub.f32 %v213, %v672
    %v674 = vand.u32 %v673, 4294901760
    %v675 = vsub.f32 %v673, %v674
    %v676 = vand.u32 %v675, 4294901760
    %677 = vmatmul.f32.gmra.mxu0 %v676
    %v678 = vpop.f32.mrf.mxu0
    %v679 = vadd.f32 %v605, %v678
    %v680 = vand.u32 %v216, 4294901760
    %v681 = vsub.f32 %v216, %v680
    %v682 = vand.u32 %v681, 4294901760
    %v683 = vsub.f32 %v681, %v682
    %v684 = vand.u32 %v683, 4294901760
    %685 = vmatmul.f32.gmra.mxu0 %v684
    %v686 = vpop.f32.mrf.mxu0
    %v687 = vadd.f32 %v605, %v686
    %688 = vdwg.mxu0
    %689 = vmatpush.msra.mxu0 0.0
    %690 = vmatpush.msra.mxu0 0.0
    %691 = vmatpush.msra.mxu0 0.0
    %692 = vmatpush.msra.mxu0 0.0
    %693 = vmatpush.msra.mxu0 0.0
    %694 = vmatpush.msra.mxu0 0.0
    %695 = vmatpush.msra.mxu0 0.0
    %696 = vmatpush.msra.mxu0 0.0
    %697 = vmatpush.msra.mxu0 0.0
    %698 = vmatpush.msra.mxu0 0.0
    %699 = vmatpush.msra.mxu0 0.0
    %700 = vmatpush.msra.mxu0 0.0
    %701 = vmatpush.msra.mxu0 0.0
    %702 = vmatpush.msra.mxu0 0.0
    %v703 = vand.u32 %v604, 4294901760
    %v704 = vsub.f32 %v604, %v703
    %v705 = vand.u32 %v704, 4294901760
    %v706 = vsub.f32 %v704, %v705
    %v707 = vand.u32 %v706, 4294901760
    %708 = vmatpush.msra.mxu0 %v707
    %v709 = vand.u32 %v603, 4294901760
    %v710 = vsub.f32 %v603, %v709
    %v711 = vand.u32 %v710, 4294901760
    %v712 = vsub.f32 %v710, %v711
    %v713 = vand.u32 %v712, 4294901760
    %714 = vmatpush.msra.mxu0 %v713
    %v715 = vand.u32 %v195, 4294901760
    %716 = vmatmul.f32.gmra.mxu0 %v715
    %v717 = vpop.f32.mrf.mxu0
    %v718 = vadd.f32 %v631, %v717
    %v719 = vand.u32 %v198, 4294901760
    %720 = vmatmul.f32.gmra.mxu0 %v719
    %v721 = vpop.f32.mrf.mxu0
    %v722 = vadd.f32 %v639, %v721
    %v723 = vand.u32 %v201, 4294901760
    %724 = vmatmul.f32.gmra.mxu0 %v723
    %v725 = vpop.f32.mrf.mxu0
    %v726 = vadd.f32 %v647, %v725
    %v727 = vand.u32 %v204, 4294901760
    %728 = vmatmul.f32.gmra.mxu0 %v727
    %v729 = vpop.f32.mrf.mxu0
    %v730 = vadd.f32 %v655, %v729
    %v731 = vand.u32 %v207, 4294901760
    %732 = vmatmul.f32.gmra.mxu0 %v731
    %v733 = vpop.f32.mrf.mxu0
    %v734 = vadd.f32 %v663, %v733
    %v735 = vand.u32 %v210, 4294901760
    %736 = vmatmul.f32.gmra.mxu0 %v735
    %v737 = vpop.f32.mrf.mxu0
    %v738 = vadd.f32 %v671, %v737
    %v739 = vand.u32 %v213, 4294901760
    %740 = vmatmul.f32.gmra.mxu0 %v739
    %v741 = vpop.f32.mrf.mxu0
    %v742 = vadd.f32 %v679, %v741
    %v743 = vand.u32 %v216, 4294901760
    %744 = vmatmul.f32.gmra.mxu0 %v743
    %v745 = vpop.f32.mrf.mxu0
    %v746 = vadd.f32 %v687, %v745
    %747 = vdwg.mxu0
    %748 = vmatpush.msra.mxu0 0.0
    %749 = vmatpush.msra.mxu0 0.0
    %750 = vmatpush.msra.mxu0 0.0
    %751 = vmatpush.msra.mxu0 0.0
    %752 = vmatpush.msra.mxu0 0.0
    %753 = vmatpush.msra.mxu0 0.0
    %754 = vmatpush.msra.mxu0 0.0
    %755 = vmatpush.msra.mxu0 0.0
    %756 = vmatpush.msra.mxu0 0.0
    %757 = vmatpush.msra.mxu0 0.0
    %758 = vmatpush.msra.mxu0 0.0
    %759 = vmatpush.msra.mxu0 0.0
    %760 = vmatpush.msra.mxu0 0.0
    %761 = vmatpush.msra.mxu0 0.0
    %v762 = vand.u32 %v604, 4294901760
    %v763 = vsub.f32 %v604, %v762
    %764 = vmatpush.msra.mxu0 %v763
    %v765 = vand.u32 %v603, 4294901760
    %v766 = vsub.f32 %v603, %v765
    %767 = vmatpush.msra.mxu0 %v766
    %v768 = vand.u32 %v195, 4294901760
    %v769 = vsub.f32 %v195, %v768
    %770 = vmatmul.f32.gmra.mxu0 %v769
    %v771 = vpop.f32.mrf.mxu0
    %v772 = vadd.f32 %v718, %v771
    %v773 = vand.u32 %v198, 4294901760
    %v774 = vsub.f32 %v198, %v773
    %775 = vmatmul.f32.gmra.mxu0 %v774
    %v776 = vpop.f32.mrf.mxu0
    %v777 = vadd.f32 %v722, %v776
    %v778 = vand.u32 %v201, 4294901760
    %v779 = vsub.f32 %v201, %v778
    %780 = vmatmul.f32.gmra.mxu0 %v779
    %v781 = vpop.f32.mrf.mxu0
    %v782 = vadd.f32 %v726, %v781
    %v783 = vand.u32 %v204, 4294901760
    %v784 = vsub.f32 %v204, %v783
    %785 = vmatmul.f32.gmra.mxu0 %v784
    %v786 = vpop.f32.mrf.mxu0
    %v787 = vadd.f32 %v730, %v786
    %v788 = vand.u32 %v207, 4294901760
    %v789 = vsub.f32 %v207, %v788
    %790 = vmatmul.f32.gmra.mxu0 %v789
    %v791 = vpop.f32.mrf.mxu0
    %v792 = vadd.f32 %v734, %v791
    %v793 = vand.u32 %v210, 4294901760
    %v794 = vsub.f32 %v210, %v793
    %795 = vmatmul.f32.gmra.mxu0 %v794
    %v796 = vpop.f32.mrf.mxu0
    %v797 = vadd.f32 %v738, %v796
    %v798 = vand.u32 %v213, 4294901760
    %v799 = vsub.f32 %v213, %v798
    %800 = vmatmul.f32.gmra.mxu0 %v799
    %v801 = vpop.f32.mrf.mxu0
    %v802 = vadd.f32 %v742, %v801
    %v803 = vand.u32 %v216, 4294901760
    %v804 = vsub.f32 %v216, %v803
    %805 = vmatmul.f32.gmra.mxu0 %v804
    %v806 = vpop.f32.mrf.mxu0
    %v807 = vadd.f32 %v746, %v806
    %808 = vdwg.mxu0
    %809 = vmatpush.msra.mxu0 0.0
    %810 = vmatpush.msra.mxu0 0.0
    %811 = vmatpush.msra.mxu0 0.0
    %812 = vmatpush.msra.mxu0 0.0
    %813 = vmatpush.msra.mxu0 0.0
    %814 = vmatpush.msra.mxu0 0.0
    %815 = vmatpush.msra.mxu0 0.0
    %816 = vmatpush.msra.mxu0 0.0
    %817 = vmatpush.msra.mxu0 0.0
    %818 = vmatpush.msra.mxu0 0.0
    %819 = vmatpush.msra.mxu0 0.0
    %820 = vmatpush.msra.mxu0 0.0
    %821 = vmatpush.msra.mxu0 0.0
    %822 = vmatpush.msra.mxu0 0.0
    %v823 = vand.u32 %v604, 4294901760
    %824 = vmatpush.msra.mxu0 %v823
    %v825 = vand.u32 %v603, 4294901760
    %826 = vmatpush.msra.mxu0 %v825
    %v827 = vand.u32 %v195, 4294901760
    %v828 = vsub.f32 %v195, %v827
    %v829 = vand.u32 %v828, 4294901760
    %830 = vmatmul.f32.gmra.mxu0 %v829
    %v831 = vpop.f32.mrf.mxu0
    %v832 = vadd.f32 %v772, %v831
    %v833 = vand.u32 %v198, 4294901760
    %v834 = vsub.f32 %v198, %v833
    %v835 = vand.u32 %v834, 4294901760
    %836 = vmatmul.f32.gmra.mxu0 %v835
    %v837 = vpop.f32.mrf.mxu0
    %v838 = vadd.f32 %v777, %v837
    %v839 = vand.u32 %v201, 4294901760
    %v840 = vsub.f32 %v201, %v839
    %v841 = vand.u32 %v840, 4294901760
    %842 = vmatmul.f32.gmra.mxu0 %v841
    %v843 = vpop.f32.mrf.mxu0
    %v844 = vadd.f32 %v782, %v843
    %v845 = vand.u32 %v204, 4294901760
    %v846 = vsub.f32 %v204, %v845
    %v847 = vand.u32 %v846, 4294901760
    %848 = vmatmul.f32.gmra.mxu0 %v847
    %v849 = vpop.f32.mrf.mxu0
    %v850 = vadd.f32 %v787, %v849
    %v851 = vand.u32 %v207, 4294901760
    %v852 = vsub.f32 %v207, %v851
    %v853 = vand.u32 %v852, 4294901760
    %854 = vmatmul.f32.gmra.mxu0 %v853
    %v855 = vpop.f32.mrf.mxu0
    %v856 = vadd.f32 %v792, %v855
    %v857 = vand.u32 %v210, 4294901760
    %v858 = vsub.f32 %v210, %v857
    %v859 = vand.u32 %v858, 4294901760
    %860 = vmatmul.f32.gmra.mxu0 %v859
    %v861 = vpop.f32.mrf.mxu0
    %v862 = vadd.f32 %v797, %v861
    %v863 = vand.u32 %v213, 4294901760
    %v864 = vsub.f32 %v213, %v863
    %v865 = vand.u32 %v864, 4294901760
    %866 = vmatmul.f32.gmra.mxu0 %v865
    %v867 = vpop.f32.mrf.mxu0
    %v868 = vadd.f32 %v802, %v867
    %v869 = vand.u32 %v216, 4294901760
    %v870 = vsub.f32 %v216, %v869
    %v871 = vand.u32 %v870, 4294901760
    %872 = vmatmul.f32.gmra.mxu0 %v871
    %v873 = vpop.f32.mrf.mxu0
    %v874 = vadd.f32 %v807, %v873
    %875 = vdwg.mxu0
    %876 = vmatpush.msra.mxu0 0.0
    %877 = vmatpush.msra.mxu0 0.0
    %878 = vmatpush.msra.mxu0 0.0
    %879 = vmatpush.msra.mxu0 0.0
    %880 = vmatpush.msra.mxu0 0.0
    %881 = vmatpush.msra.mxu0 0.0
    %882 = vmatpush.msra.mxu0 0.0
    %883 = vmatpush.msra.mxu0 0.0
    %884 = vmatpush.msra.mxu0 0.0
    %885 = vmatpush.msra.mxu0 0.0
    %886 = vmatpush.msra.mxu0 0.0
    %887 = vmatpush.msra.mxu0 0.0
    %888 = vmatpush.msra.mxu0 0.0
    %889 = vmatpush.msra.mxu0 0.0
    %v890 = vand.u32 %v604, 4294901760
    %v891 = vsub.f32 %v604, %v890
    %v892 = vand.u32 %v891, 4294901760
    %893 = vmatpush.msra.mxu0 %v892
    %v894 = vand.u32 %v603, 4294901760
    %v895 = vsub.f32 %v603, %v894
    %v896 = vand.u32 %v895, 4294901760
    %897 = vmatpush.msra.mxu0 %v896
    %v898 = vand.u32 %v195, 4294901760
    %899 = vmatmul.f32.gmra.mxu0 %v898
    %v900 = vpop.f32.mrf.mxu0
    %v901 = vadd.f32 %v832, %v900
    %v902 = vand.u32 %v198, 4294901760
    %903 = vmatmul.f32.gmra.mxu0 %v902
    %v904 = vpop.f32.mrf.mxu0
    %v905 = vadd.f32 %v838, %v904
    %v906 = vand.u32 %v201, 4294901760
    %907 = vmatmul.f32.gmra.mxu0 %v906
    %v908 = vpop.f32.mrf.mxu0
    %v909 = vadd.f32 %v844, %v908
    %v910 = vand.u32 %v204, 4294901760
    %911 = vmatmul.f32.gmra.mxu0 %v910
    %v912 = vpop.f32.mrf.mxu0
    %v913 = vadd.f32 %v850, %v912
    %v914 = vand.u32 %v207, 4294901760
    %915 = vmatmul.f32.gmra.mxu0 %v914
    %v916 = vpop.f32.mrf.mxu0
    %v917 = vadd.f32 %v856, %v916
    %v918 = vand.u32 %v210, 4294901760
    %919 = vmatmul.f32.gmra.mxu0 %v918
    %v920 = vpop.f32.mrf.mxu0
    %v921 = vadd.f32 %v862, %v920
    %v922 = vand.u32 %v213, 4294901760
    %923 = vmatmul.f32.gmra.mxu0 %v922
    %v924 = vpop.f32.mrf.mxu0
    %v925 = vadd.f32 %v868, %v924
    %v926 = vand.u32 %v216, 4294901760
    %927 = vmatmul.f32.gmra.mxu0 %v926
    %v928 = vpop.f32.mrf.mxu0
    %v929 = vadd.f32 %v874, %v928
    %930 = vdwg.mxu0
    %931 = vmatpush.msra.mxu0 0.0
    %932 = vmatpush.msra.mxu0 0.0
    %933 = vmatpush.msra.mxu0 0.0
    %934 = vmatpush.msra.mxu0 0.0
    %935 = vmatpush.msra.mxu0 0.0
    %936 = vmatpush.msra.mxu0 0.0
    %937 = vmatpush.msra.mxu0 0.0
    %938 = vmatpush.msra.mxu0 0.0
    %939 = vmatpush.msra.mxu0 0.0
    %940 = vmatpush.msra.mxu0 0.0
    %941 = vmatpush.msra.mxu0 0.0
    %942 = vmatpush.msra.mxu0 0.0
    %943 = vmatpush.msra.mxu0 0.0
    %944 = vmatpush.msra.mxu0 0.0
    %v945 = vand.u32 %v604, 4294901760
    %946 = vmatpush.msra.mxu0 %v945
    %v947 = vand.u32 %v603, 4294901760
    %948 = vmatpush.msra.mxu0 %v947
    %v949 = vand.u32 %v195, 4294901760
    %950 = vmatmul.f32.gmra.mxu0 %v949
    %v951 = vpop.f32.mrf.mxu0
    %v952 = vadd.f32 %v901, %v951
    %v953 = vand.u32 %v198, 4294901760
    %954 = vmatmul.f32.gmra.mxu0 %v953
    %v955 = vpop.f32.mrf.mxu0
    %v956 = vadd.f32 %v905, %v955
    %v957 = vand.u32 %v201, 4294901760
    %958 = vmatmul.f32.gmra.mxu0 %v957
    %v959 = vpop.f32.mrf.mxu0
    %v960 = vadd.f32 %v909, %v959
    %v961 = vand.u32 %v204, 4294901760
    %962 = vmatmul.f32.gmra.mxu0 %v961
    %v963 = vpop.f32.mrf.mxu0
    %v964 = vadd.f32 %v913, %v963
    %v965 = vand.u32 %v207, 4294901760
    %966 = vmatmul.f32.gmra.mxu0 %v965
    %v967 = vpop.f32.mrf.mxu0
    %v968 = vadd.f32 %v917, %v967
    %v969 = vand.u32 %v210, 4294901760
    %970 = vmatmul.f32.gmra.mxu0 %v969
    %v971 = vpop.f32.mrf.mxu0
    %v972 = vadd.f32 %v921, %v971
    %v973 = vand.u32 %v213, 4294901760
    %974 = vmatmul.f32.gmra.mxu0 %v973
    %v975 = vpop.f32.mrf.mxu0
    %v976 = vadd.f32 %v925, %v975
    %v977 = vand.u32 %v216, 4294901760
    %978 = vmatmul.f32.gmra.mxu0 %v977
    %v979 = vpop.f32.mrf.mxu0
    %v980 = vadd.f32 %v929, %v979
    %981 = vdwg.mxu0
    %s982 = scalar_lea.vmem [#allocation2], 64
    %983 = vst [vmem:[%s982] sm:$0xff] %v952
    %984 = vst [vmem:[%s982 + $0x8] sm:$0xff] %v956
    %985 = vst [vmem:[%s982 + $0x10] sm:$0xff] %v960
    %986 = vst [vmem:[%s982 + $0x18] sm:$0xff] %v964
    %987 = vst [vmem:[%s982 + $0x20] sm:$0xff] %v968
    %988 = vst [vmem:[%s982 + $0x28] sm:$0xff] %v972
    %989 = vst [vmem:[%s982 + $0x30] sm:$0xff] %v976
    %990 = vst [vmem:[%s982 + $0x38] sm:$0xff] %v980
    %v991 = vld [vmem:[#allocation10] sm:$0x3]
    %v992 = vld [vmem:[#allocation4] sm:$0xff]
    %v993 = vperm.slane %v991, 0
    %v994 = vmul.f32 %v992, %v993
    %v995 = vld [vmem:[#allocation2] sm:$0xff]
    %v996 = vadd.f32 %v994, %v995
    %v997 = vmax.f32 %v996, 0.0
    %v998 = vperm.slane %v991, 1
    %v999 = vmul.f32 %v997, %v998
    %v1000 = vld [vmem:[%s982] sm:$0xff]
    %v1001 = vadd.f32 %v999, %v1000
    %v1002 = vmax.f32 %v1001, 0.0
    %1003 = vst [vmem:[#allocation3] sm:$0xff] %v1002
    %v1004 = vmul.f32 %v1002, %v993
    %s1005 = scalar_lea.vmem [#allocation2], 8
    %v1006 = vld [vmem:[%s1005] sm:$0xff]
    %v1007 = vadd.f32 %v1004, %v1006
    %v1008 = vmax.f32 %v1007, 0.0
    %v1009 = vmul.f32 %v1008, %v998
    %s1010 = scalar_lea.vmem [#allocation2], 72
    %v1011 = vld [vmem:[%s1010] sm:$0xff]
    %v1012 = vadd.f32 %v1009, %v1011
    %v1013 = vmax.f32 %v1012, 0.0
    %s1014 = scalar_lea.vmem [#allocation3], 8
    %1015 = vst [vmem:[%s1014] sm:$0xff] %v1013
    %v1016 = vmul.f32 %v1013, %v993
    %s1017 = scalar_lea.vmem [#allocation2], 16
    %v1018 = vld [vmem:[%s1017] sm:$0xff]
    %v1019 = vadd.f32 %v1016, %v1018
    %v1020 = vmax.f32 %v1019, 0.0
    %v1021 = vmul.f32 %v1020, %v998
    %s1022 = scalar_lea.vmem [#allocation2], 80
    %v1023 = vld [vmem:[%s1022] sm:$0xff]
    %v1024 = vadd.f32 %v1021, %v1023
    %v1025 = vmax.f32 %v1024, 0.0
    %s1026 = scalar_lea.vmem [#allocation3], 16
    %1027 = vst [vmem:[%s1026] sm:$0xff] %v1025
    %v1028 = vmul.f32 %v1025, %v993
    %s1029 = scalar_lea.vmem [#allocation2], 24
    %v1030 = vld [vmem:[%s1029] sm:$0xff]
    %v1031 = vadd.f32 %v1028, %v1030
    %v1032 = vmax.f32 %v1031, 0.0
    %v1033 = vmul.f32 %v1032, %v998
    %s1034 = scalar_lea.vmem [#allocation2], 88
    %v1035 = vld [vmem:[%s1034] sm:$0xff]
    %v1036 = vadd.f32 %v1033, %v1035
    %v1037 = vmax.f32 %v1036, 0.0
    %s1038 = scalar_lea.vmem [#allocation3], 24
    %1039 = vst [vmem:[%s1038] sm:$0xff] %v1037
    %v1040 = vmul.f32 %v1037, %v993
    %s1041 = scalar_lea.vmem [#allocation2], 32
    %v1042 = vld [vmem:[%s1041] sm:$0xff]
    %v1043 = vadd.f32 %v1040, %v1042
    %v1044 = vmax.f32 %v1043, 0.0
    %v1045 = vmul.f32 %v1044, %v998
    %s1046 = scalar_lea.vmem [#allocation2], 96
    %v1047 = vld [vmem:[%s1046] sm:$0xff]
    %v1048 = vadd.f32 %v1045, %v1047
    %v1049 = vmax.f32 %v1048, 0.0
    %s1050 = scalar_lea.vmem [#allocation3], 32
    %1051 = vst [vmem:[%s1050] sm:$0xff] %v1049
    %v1052 = vmul.f32 %v1049, %v993
    %s1053 = scalar_lea.vmem [#allocation2], 40
    %v1054 = vld [vmem:[%s1053] sm:$0xff]
    %v1055 = vadd.f32 %v1052, %v1054
    %v1056 = vmax.f32 %v1055, 0.0
    %v1057 = vmul.f32 %v1056, %v998
    %s1058 = scalar_lea.vmem [#allocation2], 104
    %v1059 = vld [vmem:[%s1058] sm:$0xff]
    %v1060 = vadd.f32 %v1057, %v1059
    %v1061 = vmax.f32 %v1060, 0.0
    %s1062 = scalar_lea.vmem [#allocation3], 40
    %1063 = vst [vmem:[%s1062] sm:$0xff] %v1061
    %v1064 = vmul.f32 %v1061, %v993
    %s1065 = scalar_lea.vmem [#allocation2], 48
    %v1066 = vld [vmem:[%s1065] sm:$0xff]
    %v1067 = vadd.f32 %v1064, %v1066
    %v1068 = vmax.f32 %v1067, 0.0
    %v1069 = vmul.f32 %v1068, %v998
    %s1070 = scalar_lea.vmem [#allocation2], 112
    %v1071 = vld [vmem:[%s1070] sm:$0xff]
    %v1072 = vadd.f32 %v1069, %v1071
    %v1073 = vmax.f32 %v1072, 0.0
    %s1074 = scalar_lea.vmem [#allocation3], 48
    %1075 = vst [vmem:[%s1074] sm:$0xff] %v1073
    %v1076 = vmul.f32 %v1073, %v993
    %s1077 = scalar_lea.vmem [#allocation2], 56
    %v1078 = vld [vmem:[%s1077] sm:$0xff]
    %v1079 = vadd.f32 %v1076, %v1078
    %v1080 = vmax.f32 %v1079, 0.0
    %v1081 = vmul.f32 %v1080, %v998
    %s1082 = scalar_lea.vmem [#allocation2], 120
    %v1083 = vld [vmem:[%s1082] sm:$0xff]
    %v1084 = vadd.f32 %v1081, %v1083
    %v1085 = vmax.f32 %v1084, 0.0
    %s1086 = scalar_lea.vmem [#allocation3], 56
    %1087 = vst [vmem:[%s1086] sm:$0xff] %v1085
    %1088 = vst [vmem:[#allocation4] sm:$0xff] %v1085
    %v1089 = vld [vmem:[#allocation3] sm:$0xff]
    %v1090 = vld [vmem:[#allocation3 + $0x8] sm:$0xff]
    %v1091 = vld [vmem:[#allocation3 + $0x10] sm:$0xff]
    %v1092 = vld [vmem:[#allocation3 + $0x18] sm:$0xff]
    %v1093 = vld [vmem:[#allocation3 + $0x20] sm:$0xff]
    %v1094 = vld [vmem:[#allocation3 + $0x28] sm:$0xff]
    %v1095 = vld [vmem:[#allocation3 + $0x30] sm:$0xff]
    %v1096 = vld [vmem:[#allocation3 + $0x38] sm:$0xff]
    %v1097 = vrot.slane %v1091, 4
    %v1098 = vsel %vm77, %v1097, %v1089
    %v1099 = vrot.slane %v1089, 4
    %v1100 = vsel %vm77, %v1091, %v1099
    %v1102 = vunpack.c.l.s4 1983009808
    %v1103 = vunpack.c.0.s8 %v1102
    %v1104 = vperm.slane %v1098, %v1103
    %v1106 = vunpack.c.l.s4 1983009808
    %v1107 = vunpack.c.0.s8 %v1106
    %v1108 = vperm.slane %v1100, %v1107
    %v1109 = vrot.slane %v1092, 4
    %v1110 = vsel %vm77, %v1109, %v1090
    %v1111 = vrot.slane %v1090, 4
    %v1112 = vsel %vm77, %v1092, %v1111
    %v1114 = vunpack.c.l.s4 1983009808
    %v1115 = vunpack.c.0.s8 %v1114
    %v1116 = vperm.slane %v1110, %v1115
    %v1118 = vunpack.c.l.s4 1983009808
    %v1119 = vunpack.c.0.s8 %v1118
    %v1120 = vperm.slane %v1112, %v1119
    %v1121 = vrot.slane %v1095, 4
    %v1122 = vsel %vm77, %v1121, %v1093
    %v1123 = vrot.slane %v1093, 4
    %v1124 = vsel %vm77, %v1095, %v1123
    %v1126 = vunpack.c.l.s4 1983009808
    %v1127 = vunpack.c.0.s8 %v1126
    %v1128 = vperm.slane %v1122, %v1127
    %v1130 = vunpack.c.l.s4 1983009808
    %v1131 = vunpack.c.0.s8 %v1130
    %v1132 = vperm.slane %v1124, %v1131
    %v1133 = vrot.slane %v1096, 4
    %v1134 = vsel %vm77, %v1133, %v1094
    %v1135 = vrot.slane %v1094, 4
    %v1136 = vsel %vm77, %v1096, %v1135
    %v1138 = vunpack.c.l.s4 1983009808
    %v1139 = vunpack.c.0.s8 %v1138
    %v1140 = vperm.slane %v1134, %v1139
    %v1142 = vunpack.c.l.s4 1983009808
    %v1143 = vunpack.c.0.s8 %v1142
    %v1144 = vperm.slane %v1136, %v1143
    %v1145 = vrot.slane %v1116, 4
    %v1146 = vsel %vm77, %v1145, %v1104
    %v1147 = vrot.slane %v1104, 4
    %v1148 = vsel %vm77, %v1116, %v1147
    %v1150 = vunpack.c.l.s4 1934713408
    %v1151 = vunpack.c.0.s8 %v1150
    %v1152 = vperm.slane %v1146, %v1151
    %v1154 = vunpack.c.l.s4 1934713408
    %v1155 = vunpack.c.0.s8 %v1154
    %v1156 = vperm.slane %v1148, %v1155
    %v1157 = vrot.slane %v1120, 4
    %v1158 = vsel %vm77, %v1157, %v1108
    %v1159 = vrot.slane %v1108, 4
    %v1160 = vsel %vm77, %v1120, %v1159
    %v1162 = vunpack.c.l.s4 1934713408
    %v1163 = vunpack.c.0.s8 %v1162
    %v1164 = vperm.slane %v1158, %v1163
    %v1166 = vunpack.c.l.s4 1934713408
    %v1167 = vunpack.c.0.s8 %v1166
    %v1168 = vperm.slane %v1160, %v1167
    %v1169 = vrot.slane %v1140, 4
    %v1170 = vsel %vm77, %v1169, %v1128
    %v1171 = vrot.slane %v1128, 4
    %v1172 = vsel %vm77, %v1140, %v1171
    %v1174 = vunpack.c.l.s4 1934713408
    %v1175 = vunpack.c.0.s8 %v1174
    %v1176 = vperm.slane %v1170, %v1175
    %v1178 = vunpack.c.l.s4 1934713408
    %v1179 = vunpack.c.0.s8 %v1178
    %v1180 = vperm.slane %v1172, %v1179
    %v1181 = vrot.slane %v1144, 4
    %v1182 = vsel %vm77, %v1181, %v1132
    %v1183 = vrot.slane %v1132, 4
    %v1184 = vsel %vm77, %v1144, %v1183
    %v1186 = vunpack.c.l.s4 1934713408
    %v1187 = vunpack.c.0.s8 %v1186
    %v1188 = vperm.slane %v1182, %v1187
    %v1190 = vunpack.c.l.s4 1934713408
    %v1191 = vunpack.c.0.s8 %v1190
    %v1192 = vperm.slane %v1184, %v1191
    %v1193 = vrot.slane %v1176, 4
    %v1194 = vsel %vm77, %v1193, %v1152
    %v1195 = vrot.slane %v1152, 4
    %v1196 = vsel %vm77, %v1176, %v1195
    %v1197 = vrot.slane %v1180, 4
    %v1198 = vsel %vm77, %v1197, %v1156
    %v1199 = vrot.slane %v1156, 4
    %v1200 = vsel %vm77, %v1180, %v1199
    %v1201 = vrot.slane %v1188, 4
    %v1202 = vsel %vm77, %v1201, %v1164
    %v1203 = vrot.slane %v1164, 4
    %v1204 = vsel %vm77, %v1188, %v1203
    %v1205 = vrot.slane %v1192, 4
    %v1206 = vsel %vm77, %v1205, %v1168
    %v1207 = vrot.slane %v1168, 4
    %v1208 = vsel %vm77, %v1192, %v1207
    %1209 = vst [vmem:[#allocation11] sm:$0xff] %v1194
    %1210 = vst [vmem:[#allocation11 + $0x8] sm:$0xff] %v1196
    %1211 = vst [vmem:[#allocation11 + $0x10] sm:$0xff] %v1198
    %1212 = vst [vmem:[#allocation11 + $0x18] sm:$0xff] %v1200
    %1213 = vst [vmem:[#allocation11 + $0x20] sm:$0xff] %v1202
    %1214 = vst [vmem:[#allocation11 + $0x28] sm:$0xff] %v1204
    %1215 = vst [vmem:[#allocation11 + $0x30] sm:$0xff] %v1206
    %1216 = vst [vmem:[#allocation11 + $0x38] sm:$0xff] %v1208
    // Predicated region
    $region34: #{tpu_custom_call.1} parent=1 // pred_check
      _
    $region35: #{tpu_custom_call.1} parent=1 // pred_check_branch
      %1218 = sbr.rel (0) target = $region37
    $region36: #{tpu_custom_call.1} parent=1 // pred_region
      %1220 = vsyncadd [#allocation7], 0
      %s1221 = sshll.u32 [#allocation11], 4
      %s1222 = int_to_ptr.vmem [resolvable:$true] %s1221
      %s1223 = sshll.u32 %s4, 4
      %s1224 = int_to_ptr.hbm [resolvable:$true] %s1223
      %1229 = dma.vmem_to_hbm [thread:$0]  %s1222, 1024, %s1224, [#allocation7], 128, 128, 8
    $region37: #{tpu_custom_call.1} parent=1 // pred_fallthru
      _
    // Predicated region
    $region38: #{tpu_custom_call.1} parent=1 // pred_check
      _
    $region39: #{tpu_custom_call.1} parent=1 // pred_check_branch
      %1231 = sbr.rel (0) target = $region41
    $region40: #{tpu_custom_call.1} parent=1 // pred_region
      %1233 = dma.done [#allocation7], 1024
    $region41: #{tpu_custom_call.1} parent=1 // pred_fallthru
      _
    %1234 = vsyncpa [#allocation6], 1
    %1235 = vsyncpa [#allocation9], 1
    %1236 = vsyncpa [#allocation7], 1

</llo_original>
